<compile_context>
chip_gen: v5e
topology: v5e:2x2
jax: 0.10.0
libtpu: 0.0.40
codegen_flags: <defaults>
</compile_context>

<pallas_src>
import functools

import jax
import jax.numpy as jnp
from jax.experimental import pallas as pl
from jax.experimental.pallas import tpu as pltpu

LANE = 128
# Keep a single copy of resident h_l under 4 MiB so even the double-buffered
# allocation stays well inside every generation's scoped-VMEM default
# (16 MiB v5e, 32 MiB v6e/v7x).
_HL_RESIDENT_BYTES = 4 << 20


# ----------------------------- Pallas kernels ------------------------------

def sage_pre_kernel(x_ref, wl_ref, hl_ref):
    """Per-row-tile pre-pass: h_l = x @ W_l, emitted in bf16 (MXU operand)."""
    hl_ref[...] = jnp.dot(
        x_ref[...], wl_ref[...],
        preferred_element_type=jnp.float32).astype(hl_ref.dtype)


def sage_agg_kernel(a_ref, hl_ref, x_ref, wr_ref, b_ref, invdeg_ref, o_ref,
                    *, tk, hl_resident):
    """out = relu( (A_cnt @ h_l) * inv_deg + x @ W_r + b ).

    A is streamed as int8 edge counts and cast to bf16 in-kernel; the exact
    f32 1/deg row scaling happens in the k==last epilogue.  o_ref is resident
    across the K axis and used directly as the f32 accumulator.
    """
    k = pl.program_id(1)

    @pl.when(k == 0)
    def _():
        o_ref[...] = jnp.zeros_like(o_ref)

    a = a_ref[...].astype(jnp.bfloat16)          # int8 -> bf16: free VPU slack
    if hl_resident:
        start = pl.multiple_of(k * tk, tk)
        hl = hl_ref[pl.ds(start, tk), :]         # slice the resident copy
    else:
        hl = hl_ref[...]                         # streamed K tile
    o_ref[...] += jnp.dot(a, hl, preferred_element_type=jnp.float32)

    @pl.when(k == pl.num_programs(1) - 1)
    def _():
        h_r = jnp.dot(x_ref[...], wr_ref[...],
                      preferred_element_type=jnp.float32) + b_ref[...]
        o_ref[...] = jnp.maximum(o_ref[...] * invdeg_ref[...] + h_r, 0.0)


def post_mp_logsoftmax_kernel(x_ref, w1_ref, b1_ref, w2_ref, b2_ref, o_ref,
                              *, out_dim):
    h = jnp.dot(x_ref[...], w1_ref[...],
                preferred_element_type=jnp.float32) + b1_ref[...]
    # Dropout between the two Linear layers: identity in inference mode.
    logits = jnp.dot(h, w2_ref[...],
                     preferred_element_type=jnp.float32) + b2_ref[...]
    # Mask zero-padded logit columns so they don't corrupt the logsumexp.
    col = jax.lax.broadcasted_iota(jnp.int32, logits.shape, 1)
    logits = jnp.where(col < out_dim, logits, jnp.float32(-1e30))
    m = jnp.max(logits, axis=1, keepdims=True)
    s = logits - m
    lse = jnp.log(jnp.sum(jnp.exp(s), axis=1, keepdims=True))
    o_ref[...] = s - lse


# ------------------------------- wrappers ----------------------------------

def _round_up(x, m):
    return ((x + m - 1) // m) * m


def _geom(n):
    """Node padding + (row, contraction) tile sizes.

    N is padded only to a multiple of 128 (A is O(N^2); no 512-rounding).
    Tiles are the largest of the candidate sets that divide n_pad; the row
    tile is then capped so the 'parallel' axis has >= 2 tiles (v7x megacore).
    """
    n_pad = _round_up(n, LANE)

    def _largest(cands):
        for c in cands:
            if c <= n_pad and n_pad % c == 0:
                return c
        return LANE

    tk = _largest((1024, 512, 256, 128))
    tm = _largest((512, 256, 128))
    if n_pad // tm < 2:
        tm = max(64, n_pad // 2)   # always a multiple of 8 and divides n_pad
    return n_pad, tm, tk


def _pad2(a, rows, cols):
    return jnp.pad(a, ((0, rows - a.shape[0]), (0, cols - a.shape[1])))


def sage_layer(a_cnt, inv_deg, x_pad, w_l, w_r, b, *, tm, tk):
    """One SAGEConv + ReLU layer on padded, lane-dense operands."""
    n_pad, f_pad = x_pad.shape
    h_pad = w_l.shape[1]

    # Pre-pass (tiled over rows): h_l = x @ W_l in bf16.
    hl = pl.pallas_call(
        sage_pre_kernel,
        out_shape=jax.ShapeDtypeStruct((n_pad, h_pad), jnp.bfloat16),
        grid=(n_pad // tm,),
        in_specs=[
            pl.BlockSpec((tm, f_pad), lambda i: (i, 0)),
            pl.BlockSpec((f_pad, h_pad), lambda i: (0, 0)),
        ],
        out_specs=pl.BlockSpec((tm, h_pad), lambda i: (i, 0)),
        compiler_params=pltpu.CompilerParams(
            dimension_semantics=("parallel",)),
    )(x_pad, w_l)

    # Hold h_l fully VMEM-resident (single DMA, no re-streaming per row tile)
    # when it fits a conservative budget; otherwise stream per K tile.
    hl_resident = (n_pad * h_pad * 2) <= _HL_RESIDENT_BYTES
    hl_spec = (pl.BlockSpec((n_pad, h_pad), lambda i, k: (0, 0)) if hl_resident
               else pl.BlockSpec((tk, h_pad), lambda i, k: (k, 0)))

    kernel = functools.partial(sage_agg_kernel, tk=tk, hl_resident=hl_resident)

    # Aggregation (rows x K, K innermost): out = relu((A@h_l)/deg + x@W_r + b).
    return pl.pallas_call(
        kernel,
        out_shape=jax.ShapeDtypeStruct((n_pad, h_pad), jnp.float32),
        grid=(n_pad // tm, n_pad // tk),
        in_specs=[
            pl.BlockSpec((tm, tk), lambda i, k: (i, k)),         # A counts (int8)
            hl_spec,                                             # h_l (bf16)
            pl.BlockSpec((tm, f_pad), lambda i, k: (i, 0)),      # x row tile (f32)
            pl.BlockSpec((f_pad, h_pad), lambda i, k: (0, 0)),   # W_r (resident)
            pl.BlockSpec((1, h_pad), lambda i, k: (0, 0)),       # bias
            pl.BlockSpec((tm, 1), lambda i, k: (i, 0)),          # 1/deg (f32)
        ],
        out_specs=pl.BlockSpec((tm, h_pad), lambda i, k: (i, 0)),
        compiler_params=pltpu.CompilerParams(
            dimension_semantics=("parallel", "arbitrary"),
            vmem_limit_bytes=32 * 1024 * 1024),
    )(a_cnt, hl, x_pad, w_r, b, inv_deg)


def post_mp(x_pad, w1, b1, w2, b2, out_dim, *, tm):
    n_pad, h_pad = x_pad.shape
    o_pad = w2.shape[1]
    kernel = functools.partial(post_mp_logsoftmax_kernel, out_dim=out_dim)
    return pl.pallas_call(
        kernel,
        out_shape=jax.ShapeDtypeStruct((n_pad, o_pad), jnp.float32),
        grid=(n_pad // tm,),
        in_specs=[
            pl.BlockSpec((tm, h_pad), lambda i: (i, 0)),
            pl.BlockSpec((h_pad, h_pad), lambda i: (0, 0)),
            pl.BlockSpec((1, h_pad), lambda i: (0, 0)),
            pl.BlockSpec((h_pad, o_pad), lambda i: (0, 0)),
            pl.BlockSpec((1, o_pad), lambda i: (0, 0)),
        ],
        out_specs=pl.BlockSpec((tm, o_pad), lambda i: (i, 0)),
        compiler_params=pltpu.CompilerParams(
            dimension_semantics=("parallel",)),
    )(x_pad, w1, b1, w2, b2)


# ------------------------------ glue (JAX) ----------------------------------

def build_adjacency(edge_index, n_pad):
    """Unnormalized int8 adjacency (dst x src, edge multiplicities) plus exact
    f32 inverse in-degree, zero-padded to n_pad.

    Degrees come from an O(E) scatter (not an O(N^2) row-sum).  Nodes with no
    incoming edges keep an all-zero A row (PyG scatter-mean of an empty
    neighbor set -> 0); padded rows/cols are zero."""
    src = edge_index[0]
    dst = edge_index[1]
    ones_i8 = jnp.ones(src.shape, jnp.int8)
    a_cnt = jnp.zeros((n_pad, n_pad), jnp.int8).at[dst, src].add(ones_i8)
    deg = jnp.zeros((n_pad,), jnp.float32).at[dst].add(1.0)
    inv_deg = (1.0 / jnp.maximum(deg, 1.0)).reshape(n_pad, 1)
    return a_cnt, inv_deg


def init_params(key, input_dim, hidden_dim, output_dim, num_layers):
    """Deterministic synthetic parameters matching GNNStack's __init__ shapes."""
    params = {"convs": [], "post_mp": None}
    dims = [input_dim] + [hidden_dim] * num_layers
    for l in range(num_layers):
        key, k1, k2, k3 = jax.random.split(key, 4)
        f_in, f_out = dims[l], dims[l + 1]
        scale = 1.0 / jnp.sqrt(jnp.float32(f_in))
        params["convs"].append({
            # stored already transposed to [in, out] so kernels do x @ W
            "w_l": jax.random.normal(k1, (f_in, f_out), jnp.float32) * scale,
            "w_r": jax.random.normal(k2, (f_in, f_out), jnp.float32) * scale,
            "b":   jax.random.normal(k3, (1, f_out), jnp.float32) * 0.01,
        })
    key, k1, k2, k3, k4 = jax.random.split(key, 5)
    s1 = 1.0 / jnp.sqrt(jnp.float32(hidden_dim))
    params["post_mp"] = {
        "w1": jax.random.normal(k1, (hidden_dim, hidden_dim), jnp.float32) * s1,
        "b1": jax.random.normal(k2, (1, hidden_dim), jnp.float32) * 0.01,
        "w2": jax.random.normal(k3, (hidden_dim, output_dim), jnp.float32) * s1,
        "b2": jax.random.normal(k4, (1, output_dim), jnp.float32) * 0.01,
    }
    return params


@jax.jit
def gnn_stack_forward(params, x, edge_index):
    n, in_dim = x.shape
    out_dim = params["post_mp"]["w2"].shape[1]
    n_pad, tm, tk = _geom(n)

    # Zero-pad everything to lane-dense (multiple-of-128) shapes once.
    a_cnt, inv_deg = build_adjacency(edge_index, n_pad)
    x_pad = _pad2(x, n_pad, _round_up(in_dim, LANE))

    for conv in params["convs"]:
        f_in, f_out = conv["w_l"].shape
        f_in_p, f_out_p = _round_up(f_in, LANE), _round_up(f_out, LANE)
        w_l = _pad2(conv["w_l"], f_in_p, f_out_p)
        w_r = _pad2(conv["w_r"], f_in_p, f_out_p)
        b = _pad2(conv["b"], 1, f_out_p)
        # SAGEConv -> relu (fused); dropout = identity (inference)
        x_pad = sage_layer(a_cnt, inv_deg, x_pad, w_l, w_r, b, tm=tm, tk=tk)

    p = params["post_mp"]
    h_p = _round_up(p["w1"].shape[0], LANE)
    o_p = _round_up(out_dim, LANE)
    w1 = _pad2(p["w1"], h_p, h_p)
    b1 = _pad2(p["b1"], 1, h_p)
    w2 = _pad2(p["w2"], h_p, o_p)
    b2 = _pad2(p["b2"], 1, o_p)
    out_pad = post_mp(x_pad, w1, b1, w2, b2, out_dim, tm=tm)
    return out_pad[:n, :out_dim]


# --------------------------------- main --------------------------------------

if __name__ == "__main__":
    N = 32            # number of nodes
    E = 64            # number of edges
    INPUT_DIM = 16
    HIDDEN_DIM = 32
    OUTPUT_DIM = 8
    NUM_LAYERS = 2
    DROPOUT = 0.25    # unused at inference

    key = jax.random.PRNGKey(0)
    key, kx, ke = jax.random.split(key, 3)

    x = jax.random.normal(kx, (N, INPUT_DIM), jnp.float32)
    edge_index = jax.random.randint(ke, (2, E), 0, N, dtype=jnp.int32)

    params = init_params(key, INPUT_DIM, HIDDEN_DIM, OUTPUT_DIM, NUM_LAYERS)

    out = gnn_stack_forward(params, x, edge_index)
    out = jax.block_until_ready(out)

    assert out.shape == (N, OUTPUT_DIM)
    # rows of log_softmax must (log-)sum to ~0
    row_lse = jax.scipy.special.logsumexp(out, axis=1)
    assert jnp.max(jnp.abs(row_lse)) < 1e-4
    assert bool(jnp.all(jnp.isfinite(out)))

    print("KERNEL_OK")
</pallas_src>

<mosaic_0001>
module attributes {stable_mosaic.version = 11 : i64} {
  func.func @sage_pre_kernel(%arg0: i32, %arg1: memref<64x128xf32, #tpu.memory_space<vmem>>, %arg2: memref<128x128xf32, #tpu.memory_space<vmem>>, %arg3: memref<64x128xbf16, #tpu.memory_space<vmem>>) attributes {dimension_semantics = [#tpu.dimension_semantics<parallel>], iteration_bounds = array<i64: 2>, scalar_prefetch = 0 : i64, scratch_operands = 0 : i64, tpu.core_type = #tpu.core_type<tc>, window_params = [{transform_indices = @transform_0, window_bounds = array<i64: 64, 128>}, {pipeline_mode = #tpu.pipeline_mode<synchronous>, transform_indices = @transform_1, window_bounds = array<i64: 128, 128>}, {transform_indices = @transform_2, window_bounds = array<i64: 64, 128>}]} {
    %c0 = arith.constant 0 : index
    %c0_0 = arith.constant 0 : index
    %0 = vector.load %arg1[%c0, %c0_0] : memref<64x128xf32, #tpu.memory_space<vmem>>, vector<64x128xf32>
    %c0_1 = arith.constant 0 : index
    %c0_2 = arith.constant 0 : index
    %1 = vector.load %arg2[%c0_1, %c0_2] : memref<128x128xf32, #tpu.memory_space<vmem>>, vector<128x128xf32>
    %cst = arith.constant dense<0.000000e+00> : vector<64x128xf32>
    %2 = tpu.matmul %0, %1, %cst {dimension_numbers = #tpu.dot_dimension_numbers<[1], [0], [0], [1], [0, 0, 1, 1], [], []>} : vector<64x128xf32>, vector<128x128xf32>, vector<64x128xf32> -> vector<64x128xf32>
    %3 = arith.truncf %2 : vector<64x128xf32> to vector<64x128xbf16>
    %c0_3 = arith.constant 0 : index
    %c0_4 = arith.constant 0 : index
    %4 = vector.load %arg3[%c0_3, %c0_4] : memref<64x128xbf16, #tpu.memory_space<vmem>>, vector<64x128xbf16>
    tpu.vector_store %arg3[%c0_3, %c0_4], %3 {strides = array<i32>} : memref<64x128xbf16, #tpu.memory_space<vmem>>, vector<64x128xbf16>,
    return
  }
  func.func @transform_0(%arg0: i32) -> (i32, i32) {
    %c0_i32 = arith.constant 0 : i32
    %c0_i32_0 = arith.constant 0 : i32
    return %arg0, %c0_i32 : i32, i32
  }
  func.func @transform_1(%arg0: i32) -> (i32, i32) {
    %c0_i32 = arith.constant 0 : i32
    %c0_i32_0 = arith.constant 0 : i32
    %c0_i32_1 = arith.constant 0 : i32
    return %c0_i32, %c0_i32_0 : i32, i32
  }
  func.func @transform_2(%arg0: i32) -> (i32, i32) {
    %c0_i32 = arith.constant 0 : i32
    %c0_i32_0 = arith.constant 0 : i32
    return %arg0, %c0_i32 : i32, i32
  }
}

module attributes {stable_mosaic.version = 11 : i64} {
  func.func @sage_agg_kernel(%arg0: i32, %arg1: i32, %arg2: memref<64x128xi8, #tpu.memory_space<vmem>>, %arg3: memref<128x128xbf16, #tpu.memory_space<vmem>>, %arg4: memref<64x128xf32, #tpu.memory_space<vmem>>, %arg5: memref<128x128xf32, #tpu.memory_space<vmem>>, %arg6: memref<1x128xf32, #tpu.memory_space<vmem>>, %arg7: memref<64x1xf32, #tpu.memory_space<vmem>>, %arg8: memref<64x128xf32, #tpu.memory_space<vmem>>) attributes {dimension_semantics = [#tpu.dimension_semantics<parallel>, #tpu.dimension_semantics<arbitrary>], iteration_bounds = array<i64: 2, 1>, scalar_prefetch = 0 : i64, scratch_operands = 0 : i64, tpu.core_type = #tpu.core_type<tc>, window_params = [{transform_indices = @transform_0, window_bounds = array<i64: 64, 128>}, {pipeline_mode = #tpu.pipeline_mode<synchronous>, transform_indices = @transform_1, window_bounds = array<i64: 128, 128>}, {transform_indices = @transform_2, window_bounds = array<i64: 64, 128>}, {pipeline_mode = #tpu.pipeline_mode<synchronous>, transform_indices = @transform_3, window_bounds = array<i64: 128, 128>}, {pipeline_mode = #tpu.pipeline_mode<synchronous>, transform_indices = @transform_4, window_bounds = array<i64: 1, 128>}, {transform_indices = @transform_5, window_bounds = array<i64: 64, 1>}, {transform_indices = @transform_6, window_bounds = array<i64: 64, 128>}]} {
    %c0_i32 = arith.constant 0 : i32
    %0 = arith.cmpi eq, %arg1, %c0_i32 : i32
    %1 = arith.extui %0 : i1 to i32
    %c0_i32_0 = arith.constant 0 : i32
    %2 = arith.cmpi ne, %1, %c0_i32_0 : i32
    scf.if %2 {
      %cst_9 = arith.constant 0.000000e+00 : f32
      %16 = vector.broadcast %cst_9 : f32 to vector<64x128xf32>
      %c0_10 = arith.constant 0 : index
      %c0_11 = arith.constant 0 : index
      %17 = vector.load %arg8[%c0_10, %c0_11] : memref<64x128xf32, #tpu.memory_space<vmem>>, vector<64x128xf32>
      tpu.vector_store %arg8[%c0_10, %c0_11], %16 {strides = array<i32>} : memref<64x128xf32, #tpu.memory_space<vmem>>, vector<64x128xf32>,
    } else {
    }
    %c0 = arith.constant 0 : index
    %c0_1 = arith.constant 0 : index
    %3 = vector.load %arg2[%c0, %c0_1] : memref<64x128xi8, #tpu.memory_space<vmem>>, vector<64x128xi8>
    %4 = arith.sitofp %3 : vector<64x128xi8> to vector<64x128xbf16>
    %c128_i32 = arith.constant 128 : i32
    %5 = arith.muli %arg1, %c128_i32 : i32
    %6 = tpu.assume_multiple %5, 128 : i32
    %7 = arith.index_cast %6 : i32 to index
    %c0_2 = arith.constant 0 : index
    %8 = vector.load %arg3[%7, %c0_2] : memref<128x128xbf16, #tpu.memory_space<vmem>>, vector<128x128xbf16>
    %c0_3 = arith.constant 0 : index
    %c0_4 = arith.constant 0 : index
    %9 = vector.load %arg8[%c0_3, %c0_4] : memref<64x128xf32, #tpu.memory_space<vmem>>, vector<64x128xf32>
    %cst = arith.constant dense<0.000000e+00> : vector<64x128xf32>
    %10 = tpu.matmul %4, %8, %cst {dimension_numbers = #tpu.dot_dimension_numbers<[1], [0], [0], [1], [0, 0, 1, 1], [], []>} : vector<64x128xbf16>, vector<128x128xbf16>, vector<64x128xf32> -> vector<64x128xf32>
    %11 = arith.addf %9, %10 : vector<64x128xf32>
    %c0_5 = arith.constant 0 : index
    %c0_6 = arith.constant 0 : index
    %12 = vector.load %arg8[%c0_5, %c0_6] : memref<64x128xf32, #tpu.memory_space<vmem>>, vector<64x128xf32>
    tpu.vector_store %arg8[%c0_5, %c0_6], %11 {strides = array<i32>} : memref<64x128xf32, #tpu.memory_space<vmem>>, vector<64x128xf32>,
    %c0_i32_7 = arith.constant 0 : i32
    %13 = arith.cmpi eq, %arg1, %c0_i32_7 : i32
    %14 = arith.extui %13 : i1 to i32
    %c0_i32_8 = arith.constant 0 : i32
    %15 = arith.cmpi ne, %14, %c0_i32_8 : i32
    scf.if %15 {
      %c0_9 = arith.constant 0 : index
      %c0_10 = arith.constant 0 : index
      %16 = vector.load %arg4[%c0_9, %c0_10] : memref<64x128xf32, #tpu.memory_space<vmem>>, vector<64x128xf32>
      %c0_11 = arith.constant 0 : index
      %c0_12 = arith.constant 0 : index
      %17 = vector.load %arg5[%c0_11, %c0_12] : memref<128x128xf32, #tpu.memory_space<vmem>>, vector<128x128xf32>
      %cst_13 = arith.constant dense<0.000000e+00> : vector<64x128xf32>
      %18 = tpu.matmul %16, %17, %cst_13 {dimension_numbers = #tpu.dot_dimension_numbers<[1], [0], [0], [1], [0, 0, 1, 1], [], []>} : vector<64x128xf32>, vector<128x128xf32>, vector<64x128xf32> -> vector<64x128xf32>
      %c0_14 = arith.constant 0 : index
      %c0_15 = arith.constant 0 : index
      %19 = vector.load %arg6[%c0_14, %c0_15] : memref<1x128xf32, #tpu.memory_space<vmem>>, vector<1x128xf32>
      %20 = vector.broadcast %19 : vector<1x128xf32> to vector<64x128xf32>
      %21 = arith.addf %18, %20 : vector<64x128xf32>
      %c0_16 = arith.constant 0 : index
      %c0_17 = arith.constant 0 : index
      %22 = vector.load %arg8[%c0_16, %c0_17] : memref<64x128xf32, #tpu.memory_space<vmem>>, vector<64x128xf32>
      %c0_18 = arith.constant 0 : index
      %c0_19 = arith.constant 0 : index
      %23 = vector.load %arg7[%c0_18, %c0_19] : memref<64x1xf32, #tpu.memory_space<vmem>>, vector<64x1xf32>
      %24 = vector.broadcast %23 : vector<64x1xf32> to vector<64x128xf32>
      %25 = arith.mulf %22, %24 : vector<64x128xf32>
      %26 = arith.addf %25, %21 : vector<64x128xf32>
      %cst_20 = arith.constant 0.000000e+00 : f32
      %27 = vector.broadcast %cst_20 : f32 to vector<64x128xf32>
      %28 = arith.maximumf %26, %27 : vector<64x128xf32>
      %c0_21 = arith.constant 0 : index
      %c0_22 = arith.constant 0 : index
      %29 = vector.load %arg8[%c0_21, %c0_22] : memref<64x128xf32, #tpu.memory_space<vmem>>, vector<64x128xf32>
      tpu.vector_store %arg8[%c0_21, %c0_22], %28 {strides = array<i32>} : memref<64x128xf32, #tpu.memory_space<vmem>>, vector<64x128xf32>,
    } else {
    }
    return
  }
  func.func @transform_0(%arg0: i32, %arg1: i32) -> (i32, i32) {
    %c0_i32 = arith.constant 0 : i32
    return %arg0, %arg1 : i32, i32
  }
  func.func @transform_1(%arg0: i32, %arg1: i32) -> (i32, i32) {
    %c0_i32 = arith.constant 0 : i32
    %c0_i32_0 = arith.constant 0 : i32
    %c0_i32_1 = arith.constant 0 : i32
    return %c0_i32, %c0_i32_0 : i32, i32
  }
  func.func @transform_2(%arg0: i32, %arg1: i32) -> (i32, i32) {
    %c0_i32 = arith.constant 0 : i32
    %c0_i32_0 = arith.constant 0 : i32
    return %arg0, %c0_i32 : i32, i32
  }
  func.func @transform_3(%arg0: i32, %arg1: i32) -> (i32, i32) {
    %c0_i32 = arith.constant 0 : i32
    %c0_i32_0 = arith.constant 0 : i32
    %c0_i32_1 = arith.constant 0 : i32
    return %c0_i32, %c0_i32_0 : i32, i32
  }
  func.func @transform_4(%arg0: i32, %arg1: i32) -> (i32, i32) {
    %c0_i32 = arith.constant 0 : i32
    %c0_i32_0 = arith.constant 0 : i32
    %c0_i32_1 = arith.constant 0 : i32
    return %c0_i32, %c0_i32_0 : i32, i32
  }
  func.func @transform_5(%arg0: i32, %arg1: i32) -> (i32, i32) {
    %c0_i32 = arith.constant 0 : i32
    %c0_i32_0 = arith.constant 0 : i32
    return %arg0, %c0_i32 : i32, i32
  }
  func.func @transform_6(%arg0: i32, %arg1: i32) -> (i32, i32) {
    %c0_i32 = arith.constant 0 : i32
    %c0_i32_0 = arith.constant 0 : i32
    return %arg0, %c0_i32 : i32, i32
  }
}

module attributes {stable_mosaic.version = 11 : i64} {
  func.func @post_mp_logsoftmax_kernel(%arg0: i32, %arg1: memref<64x128xf32, #tpu.memory_space<vmem>>, %arg2: memref<128x128xf32, #tpu.memory_space<vmem>>, %arg3: memref<1x128xf32, #tpu.memory_space<vmem>>, %arg4: memref<128x128xf32, #tpu.memory_space<vmem>>, %arg5: memref<1x128xf32, #tpu.memory_space<vmem>>, %arg6: memref<64x128xf32, #tpu.memory_space<vmem>>) attributes {dimension_semantics = [#tpu.dimension_semantics<parallel>], iteration_bounds = array<i64: 2>, scalar_prefetch = 0 : i64, scratch_operands = 0 : i64, tpu.core_type = #tpu.core_type<tc>, window_params = [{transform_indices = @transform_0, window_bounds = array<i64: 64, 128>}, {pipeline_mode = #tpu.pipeline_mode<synchronous>, transform_indices = @transform_1, window_bounds = array<i64: 128, 128>}, {pipeline_mode = #tpu.pipeline_mode<synchronous>, transform_indices = @transform_2, window_bounds = array<i64: 1, 128>}, {pipeline_mode = #tpu.pipeline_mode<synchronous>, transform_indices = @transform_3, window_bounds = array<i64: 128, 128>}, {pipeline_mode = #tpu.pipeline_mode<synchronous>, transform_indices = @transform_4, window_bounds = array<i64: 1, 128>}, {transform_indices = @transform_5, window_bounds = array<i64: 64, 128>}]} {
    %c0 = arith.constant 0 : index
    %c0_0 = arith.constant 0 : index
    %0 = vector.load %arg1[%c0, %c0_0] : memref<64x128xf32, #tpu.memory_space<vmem>>, vector<64x128xf32>
    %c0_1 = arith.constant 0 : index
    %c0_2 = arith.constant 0 : index
    %1 = vector.load %arg2[%c0_1, %c0_2] : memref<128x128xf32, #tpu.memory_space<vmem>>, vector<128x128xf32>
    %cst = arith.constant dense<0.000000e+00> : vector<64x128xf32>
    %2 = tpu.matmul %0, %1, %cst {dimension_numbers = #tpu.dot_dimension_numbers<[1], [0], [0], [1], [0, 0, 1, 1], [], []>} : vector<64x128xf32>, vector<128x128xf32>, vector<64x128xf32> -> vector<64x128xf32>
    %c0_3 = arith.constant 0 : index
    %c0_4 = arith.constant 0 : index
    %3 = vector.load %arg3[%c0_3, %c0_4] : memref<1x128xf32, #tpu.memory_space<vmem>>, vector<1x128xf32>
    %4 = vector.broadcast %3 : vector<1x128xf32> to vector<64x128xf32>
    %5 = arith.addf %2, %4 : vector<64x128xf32>
    %c0_5 = arith.constant 0 : index
    %c0_6 = arith.constant 0 : index
    %6 = vector.load %arg4[%c0_5, %c0_6] : memref<128x128xf32, #tpu.memory_space<vmem>>, vector<128x128xf32>
    %cst_7 = arith.constant dense<0.000000e+00> : vector<64x128xf32>
    %7 = tpu.matmul %5, %6, %cst_7 {dimension_numbers = #tpu.dot_dimension_numbers<[1], [0], [0], [1], [0, 0, 1, 1], [], []>} : vector<64x128xf32>, vector<128x128xf32>, vector<64x128xf32> -> vector<64x128xf32>
    %c0_8 = arith.constant 0 : index
    %c0_9 = arith.constant 0 : index
    %8 = vector.load %arg5[%c0_8, %c0_9] : memref<1x128xf32, #tpu.memory_space<vmem>>, vector<1x128xf32>
    %9 = vector.broadcast %8 : vector<1x128xf32> to vector<64x128xf32>
    %10 = arith.addf %7, %9 : vector<64x128xf32>
    %11 = tpu.iota {dimensions = array<i32: 1>} : vector<64x128xi32>
    %c8_i32 = arith.constant 8 : i32
    %12 = vector.broadcast %c8_i32 : i32 to vector<64x128xi32>
    %13 = arith.cmpi slt, %11, %12 : vector<64x128xi32>
    %cst_10 = arith.constant -1.000000e+30 : f32
    %14 = vector.broadcast %cst_10 : f32 to vector<64x128xf32>
    %15 = arith.select %13, %10, %14 : vector<64x128xi1>, vector<64x128xf32>
    %cst_11 = arith.constant dense<0xFF800000> : vector<64xf32>
    %16 = vector.multi_reduction <maximumf>, %15, %cst_11 [1] : vector<64x128xf32> to vector<64xf32>
    %17 = vector.shape_cast %16 : vector<64xf32> to vector<64x1xf32>
    %18 = vector.broadcast %17 : vector<64x1xf32> to vector<64x128xf32>
    %19 = arith.subf %15, %18 : vector<64x128xf32>
    %20 = math.exp %19 : vector<64x128xf32>
    %cst_12 = arith.constant dense<0.000000e+00> : vector<64xf32>
    %21 = vector.multi_reduction <add>, %20, %cst_12 [1] : vector<64x128xf32> to vector<64xf32>
    %22 = vector.shape_cast %21 : vector<64xf32> to vector<64x1xf32>
    %23 = math.log %22 : vector<64x1xf32>
    %24 = vector.broadcast %23 : vector<64x1xf32> to vector<64x128xf32>
    %25 = arith.subf %19, %24 : vector<64x128xf32>
    %c0_13 = arith.constant 0 : index
    %c0_14 = arith.constant 0 : index
    %26 = vector.load %arg6[%c0_13, %c0_14] : memref<64x128xf32, #tpu.memory_space<vmem>>, vector<64x128xf32>
    tpu.vector_store %arg6[%c0_13, %c0_14], %25 {strides = array<i32>} : memref<64x128xf32, #tpu.memory_space<vmem>>, vector<64x128xf32>,
    return
  }
  func.func @transform_0(%arg0: i32) -> (i32, i32) {
    %c0_i32 = arith.constant 0 : i32
    %c0_i32_0 = arith.constant 0 : i32
    return %arg0, %c0_i32 : i32, i32
  }
  func.func @transform_1(%arg0: i32) -> (i32, i32) {
    %c0_i32 = arith.constant 0 : i32
    %c0_i32_0 = arith.constant 0 : i32
    %c0_i32_1 = arith.constant 0 : i32
    return %c0_i32, %c0_i32_0 : i32, i32
  }
  func.func @transform_2(%arg0: i32) -> (i32, i32) {
    %c0_i32 = arith.constant 0 : i32
    %c0_i32_0 = arith.constant 0 : i32
    %c0_i32_1 = arith.constant 0 : i32
    return %c0_i32, %c0_i32_0 : i32, i32
  }
  func.func @transform_3(%arg0: i32) -> (i32, i32) {
    %c0_i32 = arith.constant 0 : i32
    %c0_i32_0 = arith.constant 0 : i32
    %c0_i32_1 = arith.constant 0 : i32
    return %c0_i32, %c0_i32_0 : i32, i32
  }
  func.func @transform_4(%arg0: i32) -> (i32, i32) {
    %c0_i32 = arith.constant 0 : i32
    %c0_i32_0 = arith.constant 0 : i32
    %c0_i32_1 = arith.constant 0 : i32
    return %c0_i32, %c0_i32_0 : i32, i32
  }
  func.func @transform_5(%arg0: i32) -> (i32, i32) {
    %c0_i32 = arith.constant 0 : i32
    %c0_i32_0 = arith.constant 0 : i32
    return %arg0, %c0_i32 : i32, i32
  }
}

</mosaic_0001>

<llo_original>
// kernel: gnn_stack_forward.6
$region0: #{gnn_stack_forward.6}
  #allocation0 [shape = 'u32[]', space=smem, size = 0x4, offset = 0x4, fixed_abs, tag = 'smem constant byte address 0x4 - core index']
  #allocation1 [shape = 'u32[72,128]{1,0:T(1,128)}', space=vmem, size = 0x9000, scoped, tag = 'internal scratch']
  %s0 = inlined_call_operand.vmem [shape: s8[128,128], index: 0, kind: input, shape index: {}]
  %s1 = inlined_call_operand.vmem [shape: bf16[128,128], index: 1, kind: input, shape index: {}]
  %s2 = inlined_call_operand.vmem [shape: f32[128,128], index: 2, kind: input, shape index: {}]
  %s3 = inlined_call_operand.vmem [shape: f32[128,128], index: 3, kind: input, shape index: {}]
  %s4 = inlined_call_operand.vmem [shape: f32[1,128], index: 4, kind: input, shape index: {}]
  %s5 = inlined_call_operand.vmem [shape: f32[128,1], index: 5, kind: input, shape index: {}]
  %s6 = inlined_call_operand.vmem [shape: f32[128,128], index: 6, kind: output, shape index: {}]
  %s7 = sld [smem:[#allocation0]]
  $region65: #{gnn_stack_forward.6} parent=0
    _
  %s9 = ssub.s32 1, %s7
  %s10 = scalar_select 0, %s9, %s7
  loop: start=0, step=1, limit=4
  $region2: #{gnn_stack_forward.6} parent=0 // loop_pre_header
    _
  $region3: #{gnn_stack_forward.6} parent=0 // loop_header
    %s12 = sphi 0, %s16
    %p13 = scmp.ge.s32.totalorder %s12, 4
    %s19 = sphi 0, %s31
    %s20 = sphi 0, %s27
    %s21 = sphi 0, %s19
    %s22 = sphi 0, %s20
    %s23 = sphi 0, %s21
    %s24 = sphi 0, %s22
    %s36 = sphi 0, %s38
    %s39 = sphi 0, %s36
    %s40 = sphi 0, %s39
    %s56 = sphi 0, %s40
    %s60 = sphi 0, %s60
    %s62 = sphi 0, %s60
    %s63 = sphi 0, %s62
    %s77 = sphi 0, %s63
    %s83 = sphi 0, %s85
    %s86 = sphi 0, %s83
    %s87 = sphi 0, %s86
    %s103 = sphi 0, %s87
    %s107 = sphi 0, %s107
    %s109 = sphi 0, %s107
    %s110 = sphi 0, %s109
    %s124 = sphi 0, %s110
    %s128 = sphi 0, %s128
    %s130 = sphi 0, %s128
    %s131 = sphi 0, %s130
    %s145 = sphi 0, %s131
    %s151 = sphi 0, %s153
    %s154 = sphi 0, %s151
    %s155 = sphi 0, %s154
    %s171 = sphi 0, %s155
    %s177 = sphi 0, %s179
    %s180 = sphi 0, %s177
    %s181 = sphi 0, %s180
    %s197 = sphi 0, %s181
  $region4: #{gnn_stack_forward.6} parent=0 // loop_header_branch
    %15 = sbr.rel (%p13) target = $region8
  $region5: #{gnn_stack_forward.6} parent=0 // loop_body
    %s17 = ssub.s32 %s12, 1
    %s18 = ssub.s32 %s12, 2
    %s25 = sadd.s32 1, %s20
    %p26 = scmp.ge.s32.totalorder %s25, 1
    %s27 = scalar_select %p26, 0, %s25
    %s28 = sadd.s32 1, %s19
    %s29 = scalar_select %p26, %s28, %s19
    %p30 = scmp.ge.s32.totalorder %s29, 2
    %s31 = scalar_select %p30, 0, %s29
    %s32 = ssub.s32 %s19, %s31
    %s33 = ssub.s32 %s20, %s27
    %s34 = sor.u32 %s32, %s33
    %p35 = scmp.eq.s32.totalorder %s34, 0
    %s37 = sadd.s32 %s36, 1
    %s38 = scalar_select %p35, %s36, %s37
    %p41 = pneg %p35
    %p42 = scmp.eq.s32.totalorder %s12, 1
    %p43 = por %p41, %p42
    %p44 = scmp.ne.s32.totalorder %s36, %s39
    %p45 = scmp.eq.s32.totalorder %s12, 0
    %p46 = por %p44, %p45
    %p47 = scmp.ne.s32.totalorder %s36, %s39
    %p48 = scmp.eq.s32.totalorder %s17, 1
    %p49 = por %p47, %p48
    %p50 = scmp.ne.s32.totalorder %s39, %s40
    %p51 = scmp.eq.s32.totalorder %s17, 0
    %p52 = por %p50, %p51
    %p53 = scmp.ne.s32.totalorder %s39, %s40
    %p54 = scmp.eq.s32.totalorder %s18, 1
    %p55 = por %p53, %p54
    %p57 = scmp.ne.s32.totalorder %s40, %s56
    %p58 = scmp.eq.s32.totalorder %s18, 0
    %p59 = por %p57, %p58
    %s61 = sadd.s32 %s60, 1
    %p64 = scmp.eq.s32.totalorder %s12, 1
    %p65 = scmp.ne.s32.totalorder %s60, %s62
    %p66 = scmp.eq.s32.totalorder %s12, 0
    %p67 = por %p65, %p66
    %p68 = scmp.ne.s32.totalorder %s60, %s62
    %p69 = scmp.eq.s32.totalorder %s17, 1
    %p70 = por %p68, %p69
    %p71 = scmp.ne.s32.totalorder %s62, %s63
    %p72 = scmp.eq.s32.totalorder %s17, 0
    %p73 = por %p71, %p72
    %p74 = scmp.ne.s32.totalorder %s62, %s63
    %p75 = scmp.eq.s32.totalorder %s18, 1
    %p76 = por %p74, %p75
    %p78 = scmp.ne.s32.totalorder %s63, %s77
    %p79 = scmp.eq.s32.totalorder %s18, 0
    %p80 = por %p78, %p79
    %s81 = ssub.s32 %s19, %s31
    %p82 = scmp.eq.s32.totalorder %s81, 0
    %s84 = sadd.s32 %s83, 1
    %s85 = scalar_select %p82, %s83, %s84
    %p88 = pneg %p82
    %p89 = scmp.eq.s32.totalorder %s12, 1
    %p90 = por %p88, %p89
    %p91 = scmp.ne.s32.totalorder %s83, %s86
    %p92 = scmp.eq.s32.totalorder %s12, 0
    %p93 = por %p91, %p92
    %p94 = scmp.ne.s32.totalorder %s83, %s86
    %p95 = scmp.eq.s32.totalorder %s17, 1
    %p96 = por %p94, %p95
    %p97 = scmp.ne.s32.totalorder %s86, %s87
    %p98 = scmp.eq.s32.totalorder %s17, 0
    %p99 = por %p97, %p98
    %p100 = scmp.ne.s32.totalorder %s86, %s87
    %p101 = scmp.eq.s32.totalorder %s18, 1
    %p102 = por %p100, %p101
    %p104 = scmp.ne.s32.totalorder %s87, %s103
    %p105 = scmp.eq.s32.totalorder %s18, 0
    %p106 = por %p104, %p105
    %s108 = sadd.s32 %s107, 1
    %p111 = scmp.eq.s32.totalorder %s12, 1
    %p112 = scmp.ne.s32.totalorder %s107, %s109
    %p113 = scmp.eq.s32.totalorder %s12, 0
    %p114 = por %p112, %p113
    %p115 = scmp.ne.s32.totalorder %s107, %s109
    %p116 = scmp.eq.s32.totalorder %s17, 1
    %p117 = por %p115, %p116
    %p118 = scmp.ne.s32.totalorder %s109, %s110
    %p119 = scmp.eq.s32.totalorder %s17, 0
    %p120 = por %p118, %p119
    %p121 = scmp.ne.s32.totalorder %s109, %s110
    %p122 = scmp.eq.s32.totalorder %s18, 1
    %p123 = por %p121, %p122
    %p125 = scmp.ne.s32.totalorder %s110, %s124
    %p126 = scmp.eq.s32.totalorder %s18, 0
    %p127 = por %p125, %p126
    %s129 = sadd.s32 %s128, 1
    %p132 = scmp.eq.s32.totalorder %s12, 1
    %p133 = scmp.ne.s32.totalorder %s128, %s130
    %p134 = scmp.eq.s32.totalorder %s12, 0
    %p135 = por %p133, %p134
    %p136 = scmp.ne.s32.totalorder %s128, %s130
    %p137 = scmp.eq.s32.totalorder %s17, 1
    %p138 = por %p136, %p137
    %p139 = scmp.ne.s32.totalorder %s130, %s131
    %p140 = scmp.eq.s32.totalorder %s17, 0
    %p141 = por %p139, %p140
    %p142 = scmp.ne.s32.totalorder %s130, %s131
    %p143 = scmp.eq.s32.totalorder %s18, 1
    %p144 = por %p142, %p143
    %p146 = scmp.ne.s32.totalorder %s131, %s145
    %p147 = scmp.eq.s32.totalorder %s18, 0
    %p148 = por %p146, %p147
    %s149 = ssub.s32 %s19, %s31
    %p150 = scmp.eq.s32.totalorder %s149, 0
    %s152 = sadd.s32 %s151, 1
    %s153 = scalar_select %p150, %s151, %s152
    %p156 = pneg %p150
    %p157 = scmp.eq.s32.totalorder %s12, 1
    %p158 = por %p156, %p157
    %p159 = scmp.ne.s32.totalorder %s151, %s154
    %p160 = scmp.eq.s32.totalorder %s12, 0
    %p161 = por %p159, %p160
    %p162 = scmp.ne.s32.totalorder %s151, %s154
    %p163 = scmp.eq.s32.totalorder %s17, 1
    %p164 = por %p162, %p163
    %p165 = scmp.ne.s32.totalorder %s154, %s155
    %p166 = scmp.eq.s32.totalorder %s17, 0
    %p167 = por %p165, %p166
    %p168 = scmp.ne.s32.totalorder %s154, %s155
    %p169 = scmp.eq.s32.totalorder %s18, 1
    %p170 = por %p168, %p169
    %p172 = scmp.ne.s32.totalorder %s155, %s171
    %p173 = scmp.eq.s32.totalorder %s18, 0
    %p174 = por %p172, %p173
    %s175 = ssub.s32 %s19, %s31
    %p176 = scmp.eq.s32.totalorder %s175, 0
    %s178 = sadd.s32 %s177, 1
    %s179 = scalar_select %p176, %s177, %s178
    %p182 = pneg %p176
    %p183 = scmp.eq.s32.totalorder %s12, 1
    %p184 = por %p182, %p183
    %p185 = scmp.ne.s32.totalorder %s177, %s180
    %p186 = scmp.eq.s32.totalorder %s12, 0
    %p187 = por %p185, %p186
    %p188 = scmp.ne.s32.totalorder %s177, %s180
    %p189 = scmp.eq.s32.totalorder %s17, 1
    %p190 = por %p188, %p189
    %p191 = scmp.ne.s32.totalorder %s180, %s181
    %p192 = scmp.eq.s32.totalorder %s17, 0
    %p193 = por %p191, %p192
    %p194 = scmp.ne.s32.totalorder %s180, %s181
    %p195 = scmp.eq.s32.totalorder %s18, 1
    %p196 = por %p194, %p195
    %p198 = scmp.ne.s32.totalorder %s181, %s197
    %p199 = scmp.eq.s32.totalorder %s18, 0
    %p200 = por %p198, %p199
    %p201 = scmp.le.s32.totalorder 1, %s12
    %p202 = scmp.lt.s32.totalorder %s12, 3
    %p203 = pnand %p201, %p202
    %p204 = pneg %p203
    // Predicated region
    $region9: #{gnn_stack_forward.6} parent=5 // pred_check
      _
    $region10: #{gnn_stack_forward.6} parent=5 // pred_check_branch
      %206 = sbr.rel (%p203) target = $region12
    $region11: #{gnn_stack_forward.6} parent=5 // pred_region
      %s207 = ssub.s32 %s12, 1
      // Predicated region
      $region13: #{gnn_stack_forward.6} parent=11 // pred_check
        %p208 = pneg %p73
      $region14: #{gnn_stack_forward.6} parent=11 // pred_check_branch
        %210 = sbr.rel (%p208) target = $region16
      $region15: #{gnn_stack_forward.6} parent=11 // pred_region
        _
      $region16: #{gnn_stack_forward.6} parent=11 // pred_fallthru
        _
      // Predicated region
      $region17: #{gnn_stack_forward.6} parent=11 // pred_check
        %p211 = pneg %p120
      $region18: #{gnn_stack_forward.6} parent=11 // pred_check_branch
        %213 = sbr.rel (%p211) target = $region20
      $region19: #{gnn_stack_forward.6} parent=11 // pred_region
        _
      $region20: #{gnn_stack_forward.6} parent=11 // pred_fallthru
        _
      // Predicated region
      $region21: #{gnn_stack_forward.6} parent=11 // pred_check
        %p214 = pneg %p141
      $region22: #{gnn_stack_forward.6} parent=11 // pred_check_branch
        %216 = sbr.rel (%p214) target = $region24
      $region23: #{gnn_stack_forward.6} parent=11 // pred_region
        _
      $region24: #{gnn_stack_forward.6} parent=11 // pred_fallthru
        _
    $region12: #{gnn_stack_forward.6} parent=5 // pred_fallthru
      _
    %p217 = scmp.lt.s32.totalorder %s12, 2
    // Predicated region
    $region25: #{gnn_stack_forward.6} parent=5 // pred_check
      %p218 = pneg %p217
    $region26: #{gnn_stack_forward.6} parent=5 // pred_check_branch
      %220 = sbr.rel (%p218) target = $region28
    $region27: #{gnn_stack_forward.6} parent=5 // pred_region
      // Predicated region
      $region29: #{gnn_stack_forward.6} parent=27 // pred_check
        %p221 = pneg %p46
      $region30: #{gnn_stack_forward.6} parent=27 // pred_check_branch
        %223 = sbr.rel (%p221) target = $region32
      $region31: #{gnn_stack_forward.6} parent=27 // pred_region
        %s224 = smul.u32 8, %s19
        %p225 = scmp.lt.s32.totalorder %s224, 15
        %s226 = scalar_select %p225, %s224, 15
        %p227 = scmp.lt.s32.totalorder %s20, 0
        %s228 = scalar_select %p227, %s20, 0
        %s229 = sadd.s32 %s228, %s226
        %s230 = smul.addr %s229, 2
        %s231 = scalar_lea.vmem %s0, %s230
        %s232 = smul.u32 8, %s19
      $region32: #{gnn_stack_forward.6} parent=27 // pred_fallthru
        _
      // Predicated region
      $region33: #{gnn_stack_forward.6} parent=27 // pred_check
        %p233 = pneg %p93
      $region34: #{gnn_stack_forward.6} parent=27 // pred_check_branch
        %235 = sbr.rel (%p233) target = $region36
      $region35: #{gnn_stack_forward.6} parent=27 // pred_region
        %s236 = smul.u32 8, %s19
        %p237 = scmp.lt.s32.totalorder %s236, 15
        %s238 = scalar_select %p237, %s236, 15
        %s239 = smul.addr %s238, 8
        %s240 = scalar_lea.vmem %s2, %s239
        %s241 = smul.u32 8, %s19
      $region36: #{gnn_stack_forward.6} parent=27 // pred_fallthru
        _
      // Predicated region
      $region37: #{gnn_stack_forward.6} parent=27 // pred_check
        %p242 = pneg %p161
      $region38: #{gnn_stack_forward.6} parent=27 // pred_check_branch
        %244 = sbr.rel (%p242) target = $region40
      $region39: #{gnn_stack_forward.6} parent=27 // pred_region
        %s245 = smul.u32 8, %s19
        %p246 = scmp.lt.s32.totalorder %s245, 15
        %s247 = scalar_select %p246, %s245, 15
        %s248 = smul.addr %s247, 8
        %s249 = scalar_lea.vmem %s5, %s248
        %s250 = smul.u32 8, %s19
      $region40: #{gnn_stack_forward.6} parent=27 // pred_fallthru
        _
    $region28: #{gnn_stack_forward.6} parent=5 // pred_fallthru
      _
    %p251 = scmp.le.s32.totalorder 1, %s12
    %p252 = scmp.lt.s32.totalorder %s12, 3
    %p253 = pnand %p251, %p252
    %p254 = pneg %p253
    // Predicated region
    $region41: #{gnn_stack_forward.6} parent=5 // pred_check
      _
    $region42: #{gnn_stack_forward.6} parent=5 // pred_check_branch
      %256 = sbr.rel (%p253) target = $region44
    $region43: #{gnn_stack_forward.6} parent=5 // pred_region
      %s257 = ssub.s32 %s12, 1
      %s258 = smul.u32 8, %s21
      %p259 = scmp.lt.s32.totalorder %s258, 15
      %s260 = scalar_select %p259, %s258, 15
      %p261 = scmp.lt.s32.totalorder %s22, 0
      %s262 = scalar_select %p261, %s22, 0
      %s263 = sadd.s32 %s262, %s260
      %s264 = smul.addr %s263, 2
      %s265 = scalar_lea.vmem %s0, %s264
      %p266 = pneg %p52
      %p267 = pneg %p49
      %p268 = pneg %p73
      %p269 = pneg %p70
      %s270 = smul.u32 8, %s21
      %p271 = scmp.lt.s32.totalorder %s270, 15
      %s272 = scalar_select %p271, %s270, 15
      %s273 = smul.addr %s272, 8
      %s274 = scalar_lea.vmem %s2, %s273
      %p275 = pneg %p99
      %p276 = pneg %p96
      %p277 = pneg %p120
      %p278 = pneg %p117
      %p279 = pneg %p141
      %p280 = pneg %p138
      %s281 = smul.u32 8, %s21
      %p282 = scmp.lt.s32.totalorder %s281, 15
      %s283 = scalar_select %p282, %s281, 15
      %s284 = smul.addr %s283, 8
      %s285 = scalar_lea.vmem %s5, %s284
      %p286 = pneg %p167
      %p287 = pneg %p164
      %p288 = pneg %p193
      %p289 = pneg %p190
      %s290 = smul.u32 8, %s21
      %p291 = scmp.lt.s32.totalorder %s290, 15
      %s292 = scalar_select %p291, %s290, 15
      %s293 = smul.addr %s292, 8
      %s294 = scalar_lea.vmem %s6, %s293
      %s295 = smul.u32 8, %s21
      %p296 = scmp.lt.s32.totalorder %s295, 15
      %s297 = scalar_select %p296, %s295, 15
      %p298 = scmp.lt.s32.totalorder %s22, 0
      %s299 = scalar_select %p298, %s22, 0
      %s300 = sadd.s32 %s299, %s297
      %s301 = smul.addr %s300, 2
      %s302 = scalar_lea.vmem %s0, %s301
      %s303 = smul.u32 8, %s21
      %s304 = smul.u32 8, %s21
      %p305 = scmp.lt.s32.totalorder %s304, 15
      %s306 = scalar_select %p305, %s304, 15
      %s307 = smul.addr %s306, 8
      %s308 = scalar_lea.vmem %s2, %s307
      %s309 = smul.u32 8, %s21
      %s310 = smul.u32 8, %s21
      %p311 = scmp.lt.s32.totalorder %s310, 15
      %s312 = scalar_select %p311, %s310, 15
      %s313 = smul.addr %s312, 8
      %s314 = scalar_lea.vmem %s5, %s313
      %s315 = smul.u32 8, %s21
      %s316 = smul.u32 8, %s21
      %p317 = scmp.lt.s32.totalorder %s316, 15
      %s318 = scalar_select %p317, %s316, 15
      %s319 = smul.addr %s318, 8
      %s320 = scalar_lea.vmem %s6, %s319
      %s321 = smul.u32 8, %s21
      %p322 = scmp.eq.s32.totalorder %s22, 0
      // Predicated region
      $region45: #{gnn_stack_forward.6} parent=43 // pred_check
        %p323 = pneg %p322
      $region46: #{gnn_stack_forward.6} parent=43 // pred_check_branch
        %325 = sbr.rel (%p323) target = $region48
      $region47: #{gnn_stack_forward.6} parent=43 // pred_region
        %326 = vst [vmem:[%s320] sm:$0xff] 0.0
        %327 = vst [vmem:[%s320 + $0x8] sm:$0xff] 0.0
        %328 = vst [vmem:[%s320 + $0x10] sm:$0xff] 0.0
        %329 = vst [vmem:[%s320 + $0x18] sm:$0xff] 0.0
        %330 = vst [vmem:[%s320 + $0x20] sm:$0xff] 0.0
        %331 = vst [vmem:[%s320 + $0x28] sm:$0xff] 0.0
        %332 = vst [vmem:[%s320 + $0x30] sm:$0xff] 0.0
        %333 = vst [vmem:[%s320 + $0x38] sm:$0xff] 0.0
      $region48: #{gnn_stack_forward.6} parent=43 // pred_fallthru
        _
      %v334 = vld [vmem:[%s302] sm:$0x3]
      %v335 = vld [vmem:[%s302 + $0x2] sm:$0x3]
      %v336 = vld [vmem:[%s302 + $0x4] sm:$0x3]
      %v337 = vld [vmem:[%s302 + $0x6] sm:$0x3]
      %v338 = vld [vmem:[%s302 + $0x8] sm:$0x3]
      %v339 = vld [vmem:[%s302 + $0xa] sm:$0x3]
      %v340 = vld [vmem:[%s302 + $0xc] sm:$0x3]
      %v341 = vld [vmem:[%s302 + $0xe] sm:$0x3]
      %v342 = vunpack.c.0.s8 %v334
      %v343 = vunpack.c.0.s8 %v335
      %v344 = vunpack.c.0.s8 %v336
      %v345 = vunpack.c.0.s8 %v337
      %v346 = vunpack.c.0.s8 %v338
      %v347 = vunpack.c.0.s8 %v339
      %v348 = vunpack.c.0.s8 %v340
      %v349 = vunpack.c.0.s8 %v341
      %v350 = vcvt.s32.f32 %v342
      %v351 = vcvt.s32.f32 %v343
      %v352 = vcvt.s32.f32 %v344
      %v353 = vcvt.s32.f32 %v345
      %v354 = vcvt.s32.f32 %v346
      %v355 = vcvt.s32.f32 %v347
      %v356 = vcvt.s32.f32 %v348
      %v357 = vcvt.s32.f32 %v349
      %v358 = vpack.c.bf16 %v351, %v350
      %v359 = vpack.c.bf16 %v353, %v352
      %v360 = vpack.c.bf16 %v355, %v354
      %v361 = vpack.c.bf16 %v357, %v356
      %s362 = smul.u32 %s22, 128
      %s363 = sshra.s32 %s362, 3
      %s364 = sand.u32 %s362, 7
      %s365 = smul.addr %s363, 4
      %s366 = scalar_lea.vmem %s1, %s365
      %v367 = vld [vmem:[%s366] sm:$0xf]
      %v368 = vld [vmem:[%s366 + $0x4] sm:$0xf]
      %v369 = vld [vmem:[%s366 + $0x8] sm:$0xf]
      %v370 = vld [vmem:[%s366 + $0xc] sm:$0xf]
      %v371 = vld [vmem:[%s366 + $0x10] sm:$0xf]
      %v372 = vld [vmem:[%s366 + $0x14] sm:$0xf]
      %v373 = vld [vmem:[%s366 + $0x18] sm:$0xf]
      %v374 = vld [vmem:[%s366 + $0x1c] sm:$0xf]
      %v375 = vld [vmem:[%s366 + $0x20] sm:$0xf]
      %v376 = vld [vmem:[%s366 + $0x24] sm:$0xf]
      %v377 = vld [vmem:[%s366 + $0x28] sm:$0xf]
      %v378 = vld [vmem:[%s366 + $0x2c] sm:$0xf]
      %v379 = vld [vmem:[%s366 + $0x30] sm:$0xf]
      %v380 = vld [vmem:[%s366 + $0x34] sm:$0xf]
      %v381 = vld [vmem:[%s366 + $0x38] sm:$0xf]
      %v382 = vld [vmem:[%s366 + $0x3c] sm:$0xf]
      %v383 = vld [vmem:[%s320] sm:$0xff]
      %v384 = vld [vmem:[%s320 + $0x8] sm:$0xff]
      %v385 = vld [vmem:[%s320 + $0x10] sm:$0xff]
      %v386 = vld [vmem:[%s320 + $0x18] sm:$0xff]
      %v387 = vld [vmem:[%s320 + $0x20] sm:$0xff]
      %v388 = vld [vmem:[%s320 + $0x28] sm:$0xff]
      %v389 = vld [vmem:[%s320 + $0x30] sm:$0xff]
      %v390 = vld [vmem:[%s320 + $0x38] sm:$0xff]
      %v407 = vunpack.c.l.b16 %v367
      %v408 = vunpack.c.l.b16 %v368
      %v409 = vunpack.c.l.b16 %v369
      %v410 = vunpack.c.l.b16 %v370
      %v411 = vunpack.c.l.b16 %v371
      %v412 = vunpack.c.l.b16 %v372
      %v413 = vunpack.c.l.b16 %v373
      %v414 = vunpack.c.l.b16 %v374
      %v415 = vunpack.c.l.b16 %v375
      %v416 = vunpack.c.l.b16 %v376
      %v417 = vunpack.c.l.b16 %v377
      %v418 = vunpack.c.l.b16 %v378
      %v419 = vunpack.c.l.b16 %v379
      %v420 = vunpack.c.l.b16 %v380
      %v421 = vunpack.c.l.b16 %v381
      %v422 = vunpack.c.l.b16 %v382
      %v423 = vpack.c.b16 %v408, %v407
      %v424 = vpack.c.b16 %v410, %v409
      %v425 = vpack.c.b16 %v412, %v411
      %v426 = vpack.c.b16 %v414, %v413
      %v427 = vpack.c.b16 %v416, %v415
      %v428 = vpack.c.b16 %v418, %v417
      %v429 = vpack.c.b16 %v420, %v419
      %v430 = vpack.c.b16 %v422, %v421
      %439 = vmatpush.bf16.msra.mxu0 %v430
      %440 = vmatpush.bf16.msra.mxu0 %v429
      %441 = vmatpush.bf16.msra.mxu0 %v428
      %442 = vmatpush.bf16.msra.mxu0 %v427
      %443 = vmatpush.bf16.msra.mxu0 %v426
      %444 = vmatpush.bf16.msra.mxu0 %v425
      %445 = vmatpush.bf16.msra.mxu0 %v424
      %446 = vmatpush.bf16.msra.mxu0 %v423
      %447 = vmatmul.bf16.gmra.mxu0 %v358
      %v448 = vpop.f32.mrf.mxu0
      %v449 = vadd.f32 0.0, %v448
      %v450 = vpop.f32.mrf.mxu0
      %v451 = vadd.f32 0.0, %v450
      %452 = vmatmul.bf16.gmra.mxu0 %v359
      %v453 = vpop.f32.mrf.mxu0
      %v454 = vadd.f32 0.0, %v453
      %v455 = vpop.f32.mrf.mxu0
      %v456 = vadd.f32 0.0, %v455
      %457 = vmatmul.bf16.gmra.mxu0 %v360
      %v458 = vpop.f32.mrf.mxu0
      %v459 = vadd.f32 0.0, %v458
      %v460 = vpop.f32.mrf.mxu0
      %v461 = vadd.f32 0.0, %v460
      %462 = vmatmul.bf16.gmra.mxu0 %v361
      %v463 = vpop.f32.mrf.mxu0
      %v464 = vadd.f32 0.0, %v463
      %v465 = vpop.f32.mrf.mxu0
      %v466 = vadd.f32 0.0, %v465
      %467 = vdwg.mxu0
      %v468 = vadd.f32 %v383, %v449
      %v469 = vadd.f32 %v384, %v451
      %v470 = vadd.f32 %v385, %v454
      %v471 = vadd.f32 %v386, %v456
      %v472 = vadd.f32 %v387, %v459
      %v473 = vadd.f32 %v388, %v461
      %v474 = vadd.f32 %v389, %v464
      %v475 = vadd.f32 %v390, %v466
      %476 = vst [vmem:[%s320] sm:$0xff] %v468
      %477 = vst [vmem:[%s320 + $0x8] sm:$0xff] %v469
      %478 = vst [vmem:[%s320 + $0x10] sm:$0xff] %v470
      %479 = vst [vmem:[%s320 + $0x18] sm:$0xff] %v471
      %480 = vst [vmem:[%s320 + $0x20] sm:$0xff] %v472
      %481 = vst [vmem:[%s320 + $0x28] sm:$0xff] %v473
      %482 = vst [vmem:[%s320 + $0x30] sm:$0xff] %v474
      %483 = vst [vmem:[%s320 + $0x38] sm:$0xff] %v475
      // Predicated region
      $region49: #{gnn_stack_forward.6} parent=43 // pred_check
        %p484 = pneg %p322
      $region50: #{gnn_stack_forward.6} parent=43 // pred_check_branch
        %486 = sbr.rel (%p484) target = $region52
      $region51: #{gnn_stack_forward.6} parent=43 // pred_region
        %v487 = vld [vmem:[%s308] sm:$0xff]
        %v488 = vld [vmem:[%s308 + $0x8] sm:$0xff]
        %v489 = vld [vmem:[%s308 + $0x10] sm:$0xff]
        %v490 = vld [vmem:[%s308 + $0x18] sm:$0xff]
        %v491 = vld [vmem:[%s308 + $0x20] sm:$0xff]
        %v492 = vld [vmem:[%s308 + $0x28] sm:$0xff]
        %v493 = vld [vmem:[%s308 + $0x30] sm:$0xff]
        %v494 = vld [vmem:[%s308 + $0x38] sm:$0xff]
        %v495 = vld [vmem:[%s3] sm:$0xff]
        %v496 = vld [vmem:[%s3 + $0x8] sm:$0xff]
        %v497 = vld [vmem:[%s3 + $0x10] sm:$0xff]
        %v498 = vld [vmem:[%s3 + $0x18] sm:$0xff]
        %v499 = vld [vmem:[%s3 + $0x20] sm:$0xff]
        %v500 = vld [vmem:[%s3 + $0x28] sm:$0xff]
        %v501 = vld [vmem:[%s3 + $0x30] sm:$0xff]
        %v502 = vld [vmem:[%s3 + $0x38] sm:$0xff]
        %v503 = vld [vmem:[%s3 + $0x40] sm:$0xff]
        %v504 = vld [vmem:[%s3 + $0x48] sm:$0xff]
        %v505 = vld [vmem:[%s3 + $0x50] sm:$0xff]
        %v506 = vld [vmem:[%s3 + $0x58] sm:$0xff]
        %v507 = vld [vmem:[%s3 + $0x60] sm:$0xff]
        %v508 = vld [vmem:[%s3 + $0x68] sm:$0xff]
        %v509 = vld [vmem:[%s3 + $0x70] sm:$0xff]
        %v510 = vld [vmem:[%s3 + $0x78] sm:$0xff]
        %v511 = vld [vmem:[%s4] sm:$0x1]
        %v513 = vperm.slane %v511, 0
        %515 = vmatpush.msra.mxu0 %v510
        %516 = vmatpush.msra.mxu0 %v509
        %517 = vmatpush.msra.mxu0 %v508
        %518 = vmatpush.msra.mxu0 %v507
        %519 = vmatpush.msra.mxu0 %v506
        %520 = vmatpush.msra.mxu0 %v505
        %521 = vmatpush.msra.mxu0 %v504
        %522 = vmatpush.msra.mxu0 %v503
        %523 = vmatpush.msra.mxu0 %v502
        %524 = vmatpush.msra.mxu0 %v501
        %525 = vmatpush.msra.mxu0 %v500
        %526 = vmatpush.msra.mxu0 %v499
        %527 = vmatpush.msra.mxu0 %v498
        %528 = vmatpush.msra.mxu0 %v497
        %529 = vmatpush.msra.mxu0 %v496
        %530 = vmatpush.msra.mxu0 %v495
        %531 = vmatmul.f32.gmra.mxu0 %v487
        %v532 = vpop.f32.mrf.mxu0
        %v533 = vadd.f32 %v513, %v532
        %534 = vmatmul.f32.gmra.mxu0 %v488
        %v535 = vpop.f32.mrf.mxu0
        %v536 = vadd.f32 %v513, %v535
        %537 = vmatmul.f32.gmra.mxu0 %v489
        %v538 = vpop.f32.mrf.mxu0
        %v539 = vadd.f32 %v513, %v538
        %540 = vmatmul.f32.gmra.mxu0 %v490
        %v541 = vpop.f32.mrf.mxu0
        %v542 = vadd.f32 %v513, %v541
        %543 = vmatmul.f32.gmra.mxu0 %v491
        %v544 = vpop.f32.mrf.mxu0
        %v545 = vadd.f32 %v513, %v544
        %546 = vmatmul.f32.gmra.mxu0 %v492
        %v547 = vpop.f32.mrf.mxu0
        %v548 = vadd.f32 %v513, %v547
        %549 = vmatmul.f32.gmra.mxu0 %v493
        %v550 = vpop.f32.mrf.mxu0
        %v551 = vadd.f32 %v513, %v550
        %552 = vmatmul.f32.gmra.mxu0 %v494
        %v553 = vpop.f32.mrf.mxu0
        %v554 = vadd.f32 %v513, %v553
        %555 = vdwg.mxu0
        %v556 = vld [vmem:[%s320] sm:$0xff]
        %v557 = vld [vmem:[%s320 + $0x8] sm:$0xff]
        %v558 = vld [vmem:[%s320 + $0x10] sm:$0xff]
        %v559 = vld [vmem:[%s320 + $0x18] sm:$0xff]
        %v560 = vld [vmem:[%s320 + $0x20] sm:$0xff]
        %v561 = vld [vmem:[%s320 + $0x28] sm:$0xff]
        %v562 = vld [vmem:[%s320 + $0x30] sm:$0xff]
        %v563 = vld [vmem:[%s320 + $0x38] sm:$0xff]
        %v564 = vld [vmem:[%s314] sm:$0xff]
        %v565 = vld [vmem:[%s314 + $0x8] sm:$0xff]
        %v566 = vld [vmem:[%s314 + $0x10] sm:$0xff]
        %v567 = vld [vmem:[%s314 + $0x18] sm:$0xff]
        %v568 = vld [vmem:[%s314 + $0x20] sm:$0xff]
        %v569 = vld [vmem:[%s314 + $0x28] sm:$0xff]
        %v570 = vld [vmem:[%s314 + $0x30] sm:$0xff]
        %v571 = vld [vmem:[%s314 + $0x38] sm:$0xff]
        %573 = vset.pattern.permute.xlu0 0
        %574 = vperm.xlu0 %573, %v564
        %v575 = vpop.permute.xlu0 %574
        %578 = vset.pattern.permute.xlu0 0
        %579 = vperm.xlu0 %578, %v565
        %v580 = vpop.permute.xlu0 %579
        %583 = vset.pattern.permute.xlu0 0
        %584 = vperm.xlu0 %583, %v566
        %v585 = vpop.permute.xlu0 %584
        %588 = vset.pattern.permute.xlu0 0
        %589 = vperm.xlu0 %588, %v567
        %v590 = vpop.permute.xlu0 %589
        %593 = vset.pattern.permute.xlu0 0
        %594 = vperm.xlu0 %593, %v568
        %v595 = vpop.permute.xlu0 %594
        %598 = vset.pattern.permute.xlu0 0
        %599 = vperm.xlu0 %598, %v569
        %v600 = vpop.permute.xlu0 %599
        %603 = vset.pattern.permute.xlu0 0
        %604 = vperm.xlu0 %603, %v570
        %v605 = vpop.permute.xlu0 %604
        %608 = vset.pattern.permute.xlu0 0
        %609 = vperm.xlu0 %608, %v571
        %v610 = vpop.permute.xlu0 %609
        %v612 = vmul.f32 %v556, %v575
        %v613 = vmul.f32 %v557, %v580
        %v614 = vmul.f32 %v558, %v585
        %v615 = vmul.f32 %v559, %v590
        %v616 = vmul.f32 %v560, %v595
        %v617 = vmul.f32 %v561, %v600
        %v618 = vmul.f32 %v562, %v605
        %v619 = vmul.f32 %v563, %v610
        %v620 = vadd.f32 %v612, %v533
        %v621 = vadd.f32 %v613, %v536
        %v622 = vadd.f32 %v614, %v539
        %v623 = vadd.f32 %v615, %v542
        %v624 = vadd.f32 %v616, %v545
        %v625 = vadd.f32 %v617, %v548
        %v626 = vadd.f32 %v618, %v551
        %v627 = vadd.f32 %v619, %v554
        %v628 = vmax.f32 %v620, 0.0
        %v629 = vmax.f32 %v621, 0.0
        %v630 = vmax.f32 %v622, 0.0
        %v631 = vmax.f32 %v623, 0.0
        %v632 = vmax.f32 %v624, 0.0
        %v633 = vmax.f32 %v625, 0.0
        %v634 = vmax.f32 %v626, 0.0
        %v635 = vmax.f32 %v627, 0.0
        %636 = vst [vmem:[%s320] sm:$0xff] %v628
        %637 = vst [vmem:[%s320 + $0x8] sm:$0xff] %v629
        %638 = vst [vmem:[%s320 + $0x10] sm:$0xff] %v630
        %639 = vst [vmem:[%s320 + $0x18] sm:$0xff] %v631
        %640 = vst [vmem:[%s320 + $0x20] sm:$0xff] %v632
        %641 = vst [vmem:[%s320 + $0x28] sm:$0xff] %v633
        %642 = vst [vmem:[%s320 + $0x30] sm:$0xff] %v634
        %643 = vst [vmem:[%s320 + $0x38] sm:$0xff] %v635
      $region52: #{gnn_stack_forward.6} parent=43 // pred_fallthru
        _
      %s644 = smul.u32 8, %s21
      %p645 = scmp.lt.s32.totalorder %s644, 15
      %s646 = scalar_select %p645, %s644, 15
      %s647 = smul.addr %s646, 8
      %s648 = scalar_lea.vmem %s6, %s647
      // Predicated region
      $region53: #{gnn_stack_forward.6} parent=43 // pred_check
        %p649 = pneg %p190
      $region54: #{gnn_stack_forward.6} parent=43 // pred_check_branch
        %651 = sbr.rel (%p649) target = $region56
      $region55: #{gnn_stack_forward.6} parent=43 // pred_region
        %s652 = smul.u32 8, %s21
      $region56: #{gnn_stack_forward.6} parent=43 // pred_fallthru
        _
    $region44: #{gnn_stack_forward.6} parent=5 // pred_fallthru
      _
    %p653 = scmp.le.s32.totalorder 2, %s12
    // Predicated region
    $region57: #{gnn_stack_forward.6} parent=5 // pred_check
      %p654 = pneg %p653
    $region58: #{gnn_stack_forward.6} parent=5 // pred_check_branch
      %656 = sbr.rel (%p654) target = $region60
    $region59: #{gnn_stack_forward.6} parent=5 // pred_region
      %s657 = ssub.s32 %s12, 2
      // Predicated region
      $region61: #{gnn_stack_forward.6} parent=59 // pred_check
        %p658 = pneg %p196
      $region62: #{gnn_stack_forward.6} parent=59 // pred_check_branch
        %660 = sbr.rel (%p658) target = $region64
      $region63: #{gnn_stack_forward.6} parent=59 // pred_region
        %s661 = smul.u32 8, %s23
        %p662 = scmp.lt.s32.totalorder %s661, 15
        %s663 = scalar_select %p662, %s661, 15
        %s664 = smul.addr %s663, 8
        %s665 = scalar_lea.vmem %s6, %s664
      $region64: #{gnn_stack_forward.6} parent=59 // pred_fallthru
        _
    $region60: #{gnn_stack_forward.6} parent=5 // pred_fallthru
      _
  $region6: #{gnn_stack_forward.6} parent=0 // loop_footer
    %s16 = sadd.s32 1, %s12
  $region7: #{gnn_stack_forward.6} parent=0 // loop_footer_branch
    %11 = sbr.rel target = $region3
  $region8: #{gnn_stack_forward.6} parent=0 // loop_exit
    _

// kernel: gnn_stack_forward.9
$region0: #{gnn_stack_forward.9}
  #allocation0 [shape = 'u32[]', space=smem, size = 0x4, offset = 0x4, fixed_abs, tag = 'smem constant byte address 0x4 - core index']
  #allocation1 [shape = 'u32[72,128]{1,0:T(1,128)}', space=vmem, size = 0x9000, scoped, tag = 'internal scratch']
  %s0 = inlined_call_operand.vmem [shape: f32[128,128], index: 0, kind: input, shape index: {}]
  %s1 = inlined_call_operand.vmem [shape: f32[128,128], index: 1, kind: input, shape index: {}]
  %s2 = inlined_call_operand.vmem [shape: f32[1,128], index: 2, kind: input, shape index: {}]
  %s3 = inlined_call_operand.vmem [shape: f32[128,128], index: 3, kind: input, shape index: {}]
  %s4 = inlined_call_operand.vmem [shape: f32[1,128], index: 4, kind: input, shape index: {}]
  %s5 = inlined_call_operand.vmem [shape: f32[128,128], index: 5, kind: output, shape index: {}]
  %s6 = sld [smem:[#allocation0]]
  $region53: #{gnn_stack_forward.9} parent=0
    _
  %s8 = ssub.s32 1, %s6
  %s9 = scalar_select 0, %s8, %s6
  loop: start=0, step=1, limit=4
  $region2: #{gnn_stack_forward.9} parent=0 // loop_pre_header
    _
  $region3: #{gnn_stack_forward.9} parent=0 // loop_header
    %s11 = sphi 0, %s15
    %p12 = scmp.ge.s32.totalorder %s11, 4
    %s21 = sphi 0, %s23
    %s24 = sphi 0, %s21
    %s25 = sphi 0, %s24
    %s41 = sphi 0, %s25
    %s45 = sphi 0, %s45
    %s47 = sphi 0, %s45
    %s48 = sphi 0, %s47
    %s62 = sphi 0, %s48
    %s66 = sphi 0, %s66
    %s68 = sphi 0, %s66
    %s69 = sphi 0, %s68
    %s83 = sphi 0, %s69
    %s87 = sphi 0, %s87
    %s89 = sphi 0, %s87
    %s90 = sphi 0, %s89
    %s104 = sphi 0, %s90
    %s108 = sphi 0, %s108
    %s110 = sphi 0, %s108
    %s111 = sphi 0, %s110
    %s125 = sphi 0, %s111
    %s131 = sphi 0, %s133
    %s134 = sphi 0, %s131
    %s135 = sphi 0, %s134
    %s151 = sphi 0, %s135
  $region4: #{gnn_stack_forward.9} parent=0 // loop_header_branch
    %14 = sbr.rel (%p12) target = $region8
  $region5: #{gnn_stack_forward.9} parent=0 // loop_body
    %s16 = ssub.s32 %s11, 1
    %s17 = ssub.s32 %s11, 2
    %s18 = sadd.s32 %s11, 1
    %s19 = ssub.s32 %s11, %s18
    %p20 = scmp.eq.s32.totalorder %s19, 0
    %s22 = sadd.s32 %s21, 1
    %s23 = scalar_select %p20, %s21, %s22
    %p26 = pneg %p20
    %p27 = scmp.eq.s32.totalorder %s11, 1
    %p28 = por %p26, %p27
    %p29 = scmp.ne.s32.totalorder %s21, %s24
    %p30 = scmp.eq.s32.totalorder %s11, 0
    %p31 = por %p29, %p30
    %p32 = scmp.ne.s32.totalorder %s21, %s24
    %p33 = scmp.eq.s32.totalorder %s16, 1
    %p34 = por %p32, %p33
    %p35 = scmp.ne.s32.totalorder %s24, %s25
    %p36 = scmp.eq.s32.totalorder %s16, 0
    %p37 = por %p35, %p36
    %p38 = scmp.ne.s32.totalorder %s24, %s25
    %p39 = scmp.eq.s32.totalorder %s17, 1
    %p40 = por %p38, %p39
    %p42 = scmp.ne.s32.totalorder %s25, %s41
    %p43 = scmp.eq.s32.totalorder %s17, 0
    %p44 = por %p42, %p43
    %s46 = sadd.s32 %s45, 1
    %p49 = scmp.eq.s32.totalorder %s11, 1
    %p50 = scmp.ne.s32.totalorder %s45, %s47
    %p51 = scmp.eq.s32.totalorder %s11, 0
    %p52 = por %p50, %p51
    %p53 = scmp.ne.s32.totalorder %s45, %s47
    %p54 = scmp.eq.s32.totalorder %s16, 1
    %p55 = por %p53, %p54
    %p56 = scmp.ne.s32.totalorder %s47, %s48
    %p57 = scmp.eq.s32.totalorder %s16, 0
    %p58 = por %p56, %p57
    %p59 = scmp.ne.s32.totalorder %s47, %s48
    %p60 = scmp.eq.s32.totalorder %s17, 1
    %p61 = por %p59, %p60
    %p63 = scmp.ne.s32.totalorder %s48, %s62
    %p64 = scmp.eq.s32.totalorder %s17, 0
    %p65 = por %p63, %p64
    %s67 = sadd.s32 %s66, 1
    %p70 = scmp.eq.s32.totalorder %s11, 1
    %p71 = scmp.ne.s32.totalorder %s66, %s68
    %p72 = scmp.eq.s32.totalorder %s11, 0
    %p73 = por %p71, %p72
    %p74 = scmp.ne.s32.totalorder %s66, %s68
    %p75 = scmp.eq.s32.totalorder %s16, 1
    %p76 = por %p74, %p75
    %p77 = scmp.ne.s32.totalorder %s68, %s69
    %p78 = scmp.eq.s32.totalorder %s16, 0
    %p79 = por %p77, %p78
    %p80 = scmp.ne.s32.totalorder %s68, %s69
    %p81 = scmp.eq.s32.totalorder %s17, 1
    %p82 = por %p80, %p81
    %p84 = scmp.ne.s32.totalorder %s69, %s83
    %p85 = scmp.eq.s32.totalorder %s17, 0
    %p86 = por %p84, %p85
    %s88 = sadd.s32 %s87, 1
    %p91 = scmp.eq.s32.totalorder %s11, 1
    %p92 = scmp.ne.s32.totalorder %s87, %s89
    %p93 = scmp.eq.s32.totalorder %s11, 0
    %p94 = por %p92, %p93
    %p95 = scmp.ne.s32.totalorder %s87, %s89
    %p96 = scmp.eq.s32.totalorder %s16, 1
    %p97 = por %p95, %p96
    %p98 = scmp.ne.s32.totalorder %s89, %s90
    %p99 = scmp.eq.s32.totalorder %s16, 0
    %p100 = por %p98, %p99
    %p101 = scmp.ne.s32.totalorder %s89, %s90
    %p102 = scmp.eq.s32.totalorder %s17, 1
    %p103 = por %p101, %p102
    %p105 = scmp.ne.s32.totalorder %s90, %s104
    %p106 = scmp.eq.s32.totalorder %s17, 0
    %p107 = por %p105, %p106
    %s109 = sadd.s32 %s108, 1
    %p112 = scmp.eq.s32.totalorder %s11, 1
    %p113 = scmp.ne.s32.totalorder %s108, %s110
    %p114 = scmp.eq.s32.totalorder %s11, 0
    %p115 = por %p113, %p114
    %p116 = scmp.ne.s32.totalorder %s108, %s110
    %p117 = scmp.eq.s32.totalorder %s16, 1
    %p118 = por %p116, %p117
    %p119 = scmp.ne.s32.totalorder %s110, %s111
    %p120 = scmp.eq.s32.totalorder %s16, 0
    %p121 = por %p119, %p120
    %p122 = scmp.ne.s32.totalorder %s110, %s111
    %p123 = scmp.eq.s32.totalorder %s17, 1
    %p124 = por %p122, %p123
    %p126 = scmp.ne.s32.totalorder %s111, %s125
    %p127 = scmp.eq.s32.totalorder %s17, 0
    %p128 = por %p126, %p127
    %s129 = ssub.s32 %s11, %s18
    %p130 = scmp.eq.s32.totalorder %s129, 0
    %s132 = sadd.s32 %s131, 1
    %s133 = scalar_select %p130, %s131, %s132
    %p136 = pneg %p130
    %p137 = scmp.eq.s32.totalorder %s11, 1
    %p138 = por %p136, %p137
    %p139 = scmp.ne.s32.totalorder %s131, %s134
    %p140 = scmp.eq.s32.totalorder %s11, 0
    %p141 = por %p139, %p140
    %p142 = scmp.ne.s32.totalorder %s131, %s134
    %p143 = scmp.eq.s32.totalorder %s16, 1
    %p144 = por %p142, %p143
    %p145 = scmp.ne.s32.totalorder %s134, %s135
    %p146 = scmp.eq.s32.totalorder %s16, 0
    %p147 = por %p145, %p146
    %p148 = scmp.ne.s32.totalorder %s134, %s135
    %p149 = scmp.eq.s32.totalorder %s17, 1
    %p150 = por %p148, %p149
    %p152 = scmp.ne.s32.totalorder %s135, %s151
    %p153 = scmp.eq.s32.totalorder %s17, 0
    %p154 = por %p152, %p153
    %p155 = scmp.le.s32.totalorder 1, %s11
    %p156 = scmp.lt.s32.totalorder %s11, 3
    %p157 = pnand %p155, %p156
    %p158 = pneg %p157
    // Predicated region
    $region9: #{gnn_stack_forward.9} parent=5 // pred_check
      _
    $region10: #{gnn_stack_forward.9} parent=5 // pred_check_branch
      %160 = sbr.rel (%p157) target = $region12
    $region11: #{gnn_stack_forward.9} parent=5 // pred_region
      %s161 = ssub.s32 %s11, 1
      // Predicated region
      $region13: #{gnn_stack_forward.9} parent=11 // pred_check
        %p162 = pneg %p58
      $region14: #{gnn_stack_forward.9} parent=11 // pred_check_branch
        %164 = sbr.rel (%p162) target = $region16
      $region15: #{gnn_stack_forward.9} parent=11 // pred_region
        _
      $region16: #{gnn_stack_forward.9} parent=11 // pred_fallthru
        _
      // Predicated region
      $region17: #{gnn_stack_forward.9} parent=11 // pred_check
        %p165 = pneg %p79
      $region18: #{gnn_stack_forward.9} parent=11 // pred_check_branch
        %167 = sbr.rel (%p165) target = $region20
      $region19: #{gnn_stack_forward.9} parent=11 // pred_region
        _
      $region20: #{gnn_stack_forward.9} parent=11 // pred_fallthru
        _
      // Predicated region
      $region21: #{gnn_stack_forward.9} parent=11 // pred_check
        %p168 = pneg %p100
      $region22: #{gnn_stack_forward.9} parent=11 // pred_check_branch
        %170 = sbr.rel (%p168) target = $region24
      $region23: #{gnn_stack_forward.9} parent=11 // pred_region
        _
      $region24: #{gnn_stack_forward.9} parent=11 // pred_fallthru
        _
      // Predicated region
      $region25: #{gnn_stack_forward.9} parent=11 // pred_check
        %p171 = pneg %p121
      $region26: #{gnn_stack_forward.9} parent=11 // pred_check_branch
        %173 = sbr.rel (%p171) target = $region28
      $region27: #{gnn_stack_forward.9} parent=11 // pred_region
        _
      $region28: #{gnn_stack_forward.9} parent=11 // pred_fallthru
        _
    $region12: #{gnn_stack_forward.9} parent=5 // pred_fallthru
      _
    %p174 = scmp.lt.s32.totalorder %s11, 2
    // Predicated region
    $region29: #{gnn_stack_forward.9} parent=5 // pred_check
      %p175 = pneg %p174
    $region30: #{gnn_stack_forward.9} parent=5 // pred_check_branch
      %177 = sbr.rel (%p175) target = $region32
    $region31: #{gnn_stack_forward.9} parent=5 // pred_region
      // Predicated region
      $region33: #{gnn_stack_forward.9} parent=31 // pred_check
        %p178 = pneg %p31
      $region34: #{gnn_stack_forward.9} parent=31 // pred_check_branch
        %180 = sbr.rel (%p178) target = $region36
      $region35: #{gnn_stack_forward.9} parent=31 // pred_region
        %s181 = smul.u32 8, %s11
        %p182 = scmp.lt.s32.totalorder %s181, 15
        %s183 = scalar_select %p182, %s181, 15
        %s184 = smul.addr %s183, 8
        %s185 = scalar_lea.vmem %s0, %s184
        %s186 = smul.u32 8, %s11
      $region36: #{gnn_stack_forward.9} parent=31 // pred_fallthru
        _
    $region32: #{gnn_stack_forward.9} parent=5 // pred_fallthru
      _
    %p187 = scmp.le.s32.totalorder 1, %s11
    %p188 = scmp.lt.s32.totalorder %s11, 3
    %p189 = pnand %p187, %p188
    %p190 = pneg %p189
    // Predicated region
    $region37: #{gnn_stack_forward.9} parent=5 // pred_check
      _
    $region38: #{gnn_stack_forward.9} parent=5 // pred_check_branch
      %192 = sbr.rel (%p189) target = $region40
    $region39: #{gnn_stack_forward.9} parent=5 // pred_region
      %s193 = ssub.s32 %s11, 1
      %s194 = smul.u32 8, %s16
      %p195 = scmp.lt.s32.totalorder %s194, 15
      %s196 = scalar_select %p195, %s194, 15
      %s197 = smul.addr %s196, 8
      %s198 = scalar_lea.vmem %s0, %s197
      %p199 = pneg %p37
      %p200 = pneg %p34
      %p201 = pneg %p58
      %p202 = pneg %p55
      %p203 = pneg %p79
      %p204 = pneg %p76
      %p205 = pneg %p100
      %p206 = pneg %p97
      %p207 = pneg %p121
      %p208 = pneg %p118
      %p209 = pneg %p147
      %p210 = pneg %p144
      %s211 = smul.u32 8, %s16
      %p212 = scmp.lt.s32.totalorder %s211, 15
      %s213 = scalar_select %p212, %s211, 15
      %s214 = smul.addr %s213, 8
      %s215 = scalar_lea.vmem %s5, %s214
      %s216 = smul.u32 8, %s16
      %p217 = scmp.lt.s32.totalorder %s216, 15
      %s218 = scalar_select %p217, %s216, 15
      %s219 = smul.addr %s218, 8
      %s220 = scalar_lea.vmem %s0, %s219
      %s221 = smul.u32 8, %s16
      %s222 = smul.u32 8, %s16
      %p223 = scmp.lt.s32.totalorder %s222, 15
      %s224 = scalar_select %p223, %s222, 15
      %s225 = smul.addr %s224, 8
      %s226 = scalar_lea.vmem %s5, %s225
      %s227 = smul.u32 8, %s16
      %v228 = vld [vmem:[%s220] sm:$0xff]
      %v229 = vld [vmem:[%s220 + $0x8] sm:$0xff]
      %v230 = vld [vmem:[%s220 + $0x10] sm:$0xff]
      %v231 = vld [vmem:[%s220 + $0x18] sm:$0xff]
      %v232 = vld [vmem:[%s220 + $0x20] sm:$0xff]
      %v233 = vld [vmem:[%s220 + $0x28] sm:$0xff]
      %v234 = vld [vmem:[%s220 + $0x30] sm:$0xff]
      %v235 = vld [vmem:[%s220 + $0x38] sm:$0xff]
      %v236 = vld [vmem:[%s1] sm:$0xff]
      %v237 = vld [vmem:[%s1 + $0x8] sm:$0xff]
      %v238 = vld [vmem:[%s1 + $0x10] sm:$0xff]
      %v239 = vld [vmem:[%s1 + $0x18] sm:$0xff]
      %v240 = vld [vmem:[%s1 + $0x20] sm:$0xff]
      %v241 = vld [vmem:[%s1 + $0x28] sm:$0xff]
      %v242 = vld [vmem:[%s1 + $0x30] sm:$0xff]
      %v243 = vld [vmem:[%s1 + $0x38] sm:$0xff]
      %v244 = vld [vmem:[%s1 + $0x40] sm:$0xff]
      %v245 = vld [vmem:[%s1 + $0x48] sm:$0xff]
      %v246 = vld [vmem:[%s1 + $0x50] sm:$0xff]
      %v247 = vld [vmem:[%s1 + $0x58] sm:$0xff]
      %v248 = vld [vmem:[%s1 + $0x60] sm:$0xff]
      %v249 = vld [vmem:[%s1 + $0x68] sm:$0xff]
      %v250 = vld [vmem:[%s1 + $0x70] sm:$0xff]
      %v251 = vld [vmem:[%s1 + $0x78] sm:$0xff]
      %v252 = vld [vmem:[%s2] sm:$0x1]
      %v254 = vperm.slane %v252, 0
      %256 = vmatpush.msra.mxu0 %v251
      %257 = vmatpush.msra.mxu0 %v250
      %258 = vmatpush.msra.mxu0 %v249
      %259 = vmatpush.msra.mxu0 %v248
      %260 = vmatpush.msra.mxu0 %v247
      %261 = vmatpush.msra.mxu0 %v246
      %262 = vmatpush.msra.mxu0 %v245
      %263 = vmatpush.msra.mxu0 %v244
      %264 = vmatpush.msra.mxu0 %v243
      %265 = vmatpush.msra.mxu0 %v242
      %266 = vmatpush.msra.mxu0 %v241
      %267 = vmatpush.msra.mxu0 %v240
      %268 = vmatpush.msra.mxu0 %v239
      %269 = vmatpush.msra.mxu0 %v238
      %270 = vmatpush.msra.mxu0 %v237
      %271 = vmatpush.msra.mxu0 %v236
      %272 = vmatmul.f32.gmra.mxu0 %v228
      %v273 = vpop.f32.mrf.mxu0
      %v274 = vadd.f32 %v254, %v273
      %275 = vmatmul.f32.gmra.mxu0 %v229
      %v276 = vpop.f32.mrf.mxu0
      %v277 = vadd.f32 %v254, %v276
      %278 = vmatmul.f32.gmra.mxu0 %v230
      %v279 = vpop.f32.mrf.mxu0
      %v280 = vadd.f32 %v254, %v279
      %281 = vmatmul.f32.gmra.mxu0 %v231
      %v282 = vpop.f32.mrf.mxu0
      %v283 = vadd.f32 %v254, %v282
      %284 = vmatmul.f32.gmra.mxu0 %v232
      %v285 = vpop.f32.mrf.mxu0
      %v286 = vadd.f32 %v254, %v285
      %287 = vmatmul.f32.gmra.mxu0 %v233
      %v288 = vpop.f32.mrf.mxu0
      %v289 = vadd.f32 %v254, %v288
      %290 = vmatmul.f32.gmra.mxu0 %v234
      %v291 = vpop.f32.mrf.mxu0
      %v292 = vadd.f32 %v254, %v291
      %293 = vmatmul.f32.gmra.mxu0 %v235
      %v294 = vpop.f32.mrf.mxu0
      %v295 = vadd.f32 %v254, %v294
      %296 = vdwg.mxu0
      %v297 = vld [vmem:[%s3] sm:$0xff]
      %v298 = vld [vmem:[%s3 + $0x8] sm:$0xff]
      %v299 = vld [vmem:[%s3 + $0x10] sm:$0xff]
      %v300 = vld [vmem:[%s3 + $0x18] sm:$0xff]
      %v301 = vld [vmem:[%s3 + $0x20] sm:$0xff]
      %v302 = vld [vmem:[%s3 + $0x28] sm:$0xff]
      %v303 = vld [vmem:[%s3 + $0x30] sm:$0xff]
      %v304 = vld [vmem:[%s3 + $0x38] sm:$0xff]
      %v305 = vld [vmem:[%s3 + $0x40] sm:$0xff]
      %v306 = vld [vmem:[%s3 + $0x48] sm:$0xff]
      %v307 = vld [vmem:[%s3 + $0x50] sm:$0xff]
      %v308 = vld [vmem:[%s3 + $0x58] sm:$0xff]
      %v309 = vld [vmem:[%s3 + $0x60] sm:$0xff]
      %v310 = vld [vmem:[%s3 + $0x68] sm:$0xff]
      %v311 = vld [vmem:[%s3 + $0x70] sm:$0xff]
      %v312 = vld [vmem:[%s3 + $0x78] sm:$0xff]
      %v313 = vld [vmem:[%s4] sm:$0x1]
      %v315 = vperm.slane %v313, 0
      %317 = vmatpush.msra.mxu0 %v312
      %318 = vmatpush.msra.mxu0 %v311
      %319 = vmatpush.msra.mxu0 %v310
      %320 = vmatpush.msra.mxu0 %v309
      %321 = vmatpush.msra.mxu0 %v308
      %322 = vmatpush.msra.mxu0 %v307
      %323 = vmatpush.msra.mxu0 %v306
      %324 = vmatpush.msra.mxu0 %v305
      %325 = vmatpush.msra.mxu0 %v304
      %326 = vmatpush.msra.mxu0 %v303
      %327 = vmatpush.msra.mxu0 %v302
      %328 = vmatpush.msra.mxu0 %v301
      %329 = vmatpush.msra.mxu0 %v300
      %330 = vmatpush.msra.mxu0 %v299
      %331 = vmatpush.msra.mxu0 %v298
      %332 = vmatpush.msra.mxu0 %v297
      %333 = vmatmul.f32.gmra.mxu0 %v274
      %v334 = vpop.f32.mrf.mxu0
      %v335 = vadd.f32 %v315, %v334
      %336 = vmatmul.f32.gmra.mxu0 %v277
      %v337 = vpop.f32.mrf.mxu0
      %v338 = vadd.f32 %v315, %v337
      %339 = vmatmul.f32.gmra.mxu0 %v280
      %v340 = vpop.f32.mrf.mxu0
      %v341 = vadd.f32 %v315, %v340
      %342 = vmatmul.f32.gmra.mxu0 %v283
      %v343 = vpop.f32.mrf.mxu0
      %v344 = vadd.f32 %v315, %v343
      %345 = vmatmul.f32.gmra.mxu0 %v286
      %v346 = vpop.f32.mrf.mxu0
      %v347 = vadd.f32 %v315, %v346
      %348 = vmatmul.f32.gmra.mxu0 %v289
      %v349 = vpop.f32.mrf.mxu0
      %v350 = vadd.f32 %v315, %v349
      %351 = vmatmul.f32.gmra.mxu0 %v292
      %v352 = vpop.f32.mrf.mxu0
      %v353 = vadd.f32 %v315, %v352
      %354 = vmatmul.f32.gmra.mxu0 %v295
      %v355 = vpop.f32.mrf.mxu0
      %v356 = vadd.f32 %v315, %v355
      %357 = vdwg.mxu0
      %v358 = vlaneseq
      %v359 = vand.u32 %v358, 127
      %vm360 = vcmp.lt.s32.totalorder %v359, 8
      %v361 = vsel %vm360, %v335, -1e+30
      %v362 = vsel %vm360, %v338, -1e+30
      %v363 = vsel %vm360, %v341, -1e+30
      %v364 = vsel %vm360, %v344, -1e+30
      %v365 = vsel %vm360, %v347, -1e+30
      %v366 = vsel %vm360, %v350, -1e+30
      %v367 = vsel %vm360, %v353, -1e+30
      %v368 = vsel %vm360, %v356, -1e+30
      %369 = vmax.xlane.f32.xlu0 %v361
      %v370 = vpop.xlane.xlu0 %369
      %371 = vmax.xlane.f32.xlu0 %v362
      %v372 = vpop.xlane.xlu0 %371
      %373 = vmax.xlane.f32.xlu0 %v363
      %v374 = vpop.xlane.xlu0 %373
      %375 = vmax.xlane.f32.xlu0 %v364
      %v376 = vpop.xlane.xlu0 %375
      %377 = vmax.xlane.f32.xlu0 %v365
      %v378 = vpop.xlane.xlu0 %377
      %379 = vmax.xlane.f32.xlu0 %v366
      %v380 = vpop.xlane.xlu0 %379
      %381 = vmax.xlane.f32.xlu0 %v367
      %v382 = vpop.xlane.xlu0 %381
      %383 = vmax.xlane.f32.xlu0 %v368
      %v384 = vpop.xlane.xlu0 %383
      %v385 = vsub.f32 %v361, %v370
      %v386 = vsub.f32 %v362, %v372
      %v387 = vsub.f32 %v363, %v374
      %v388 = vsub.f32 %v364, %v376
      %v389 = vsub.f32 %v365, %v378
      %v390 = vsub.f32 %v366, %v380
      %v391 = vsub.f32 %v367, %v382
      %v392 = vsub.f32 %v368, %v384
      %v393 = vmul.f32 %v385, 1.442695
      %v394 = vpow.pop %v393
      %v395 = vmul.f32 %v386, 1.442695
      %v396 = vpow.pop %v395
      %v397 = vmul.f32 %v387, 1.442695
      %v398 = vpow.pop %v397
      %v399 = vmul.f32 %v388, 1.442695
      %v400 = vpow.pop %v399
      %v401 = vmul.f32 %v389, 1.442695
      %v402 = vpow.pop %v401
      %v403 = vmul.f32 %v390, 1.442695
      %v404 = vpow.pop %v403
      %v405 = vmul.f32 %v391, 1.442695
      %v406 = vpow.pop %v405
      %v407 = vmul.f32 %v392, 1.442695
      %v408 = vpow.pop %v407
      %409 = vadd.xlane.f32.xlu0 %v394
      %v410 = vpop.xlane.xlu0 %409
      %411 = vadd.xlane.f32.xlu0 %v396
      %v412 = vpop.xlane.xlu0 %411
      %413 = vadd.xlane.f32.xlu0 %v398
      %v414 = vpop.xlane.xlu0 %413
      %415 = vadd.xlane.f32.xlu0 %v400
      %v416 = vpop.xlane.xlu0 %415
      %417 = vadd.xlane.f32.xlu0 %v402
      %v418 = vpop.xlane.xlu0 %417
      %419 = vadd.xlane.f32.xlu0 %v404
      %v420 = vpop.xlane.xlu0 %419
      %421 = vadd.xlane.f32.xlu0 %v406
      %v422 = vpop.xlane.xlu0 %421
      %423 = vadd.xlane.f32.xlu0 %v408
      %v424 = vpop.xlane.xlu0 %423
      %v425 = vlog2.pop %v410
      %v426 = vmul.f32 %v425, 0.6931472
      %v427 = vlog2.pop %v412
      %v428 = vmul.f32 %v427, 0.6931472
      %v429 = vlog2.pop %v414
      %v430 = vmul.f32 %v429, 0.6931472
      %v431 = vlog2.pop %v416
      %v432 = vmul.f32 %v431, 0.6931472
      %v433 = vlog2.pop %v418
      %v434 = vmul.f32 %v433, 0.6931472
      %v435 = vlog2.pop %v420
      %v436 = vmul.f32 %v435, 0.6931472
      %v437 = vlog2.pop %v422
      %v438 = vmul.f32 %v437, 0.6931472
      %v439 = vlog2.pop %v424
      %v440 = vmul.f32 %v439, 0.6931472
      %v441 = vsub.f32 %v385, %v426
      %v442 = vsub.f32 %v386, %v428
      %v443 = vsub.f32 %v387, %v430
      %v444 = vsub.f32 %v388, %v432
      %v445 = vsub.f32 %v389, %v434
      %v446 = vsub.f32 %v390, %v436
      %v447 = vsub.f32 %v391, %v438
      %v448 = vsub.f32 %v392, %v440
      %449 = vst [vmem:[%s226] sm:$0xff] %v441
      %450 = vst [vmem:[%s226 + $0x8] sm:$0xff] %v442
      %451 = vst [vmem:[%s226 + $0x10] sm:$0xff] %v443
      %452 = vst [vmem:[%s226 + $0x18] sm:$0xff] %v444
      %453 = vst [vmem:[%s226 + $0x20] sm:$0xff] %v445
      %454 = vst [vmem:[%s226 + $0x28] sm:$0xff] %v446
      %455 = vst [vmem:[%s226 + $0x30] sm:$0xff] %v447
      %456 = vst [vmem:[%s226 + $0x38] sm:$0xff] %v448
      %s457 = smul.u32 8, %s16
      %p458 = scmp.lt.s32.totalorder %s457, 15
      %s459 = scalar_select %p458, %s457, 15
      %s460 = smul.addr %s459, 8
      %s461 = scalar_lea.vmem %s5, %s460
      // Predicated region
      $region41: #{gnn_stack_forward.9} parent=39 // pred_check
        %p462 = pneg %p144
      $region42: #{gnn_stack_forward.9} parent=39 // pred_check_branch
        %464 = sbr.rel (%p462) target = $region44
      $region43: #{gnn_stack_forward.9} parent=39 // pred_region
        %s465 = smul.u32 8, %s16
      $region44: #{gnn_stack_forward.9} parent=39 // pred_fallthru
        _
    $region40: #{gnn_stack_forward.9} parent=5 // pred_fallthru
      _
    %p466 = scmp.le.s32.totalorder 2, %s11
    // Predicated region
    $region45: #{gnn_stack_forward.9} parent=5 // pred_check
      %p467 = pneg %p466
    $region46: #{gnn_stack_forward.9} parent=5 // pred_check_branch
      %469 = sbr.rel (%p467) target = $region48
    $region47: #{gnn_stack_forward.9} parent=5 // pred_region
      %s470 = ssub.s32 %s11, 2
      // Predicated region
      $region49: #{gnn_stack_forward.9} parent=47 // pred_check
        %p471 = pneg %p150
      $region50: #{gnn_stack_forward.9} parent=47 // pred_check_branch
        %473 = sbr.rel (%p471) target = $region52
      $region51: #{gnn_stack_forward.9} parent=47 // pred_region
        %s474 = smul.u32 8, %s17
        %p475 = scmp.lt.s32.totalorder %s474, 15
        %s476 = scalar_select %p475, %s474, 15
        %s477 = smul.addr %s476, 8
        %s478 = scalar_lea.vmem %s5, %s477
      $region52: #{gnn_stack_forward.9} parent=47 // pred_fallthru
        _
    $region48: #{gnn_stack_forward.9} parent=5 // pred_fallthru
      _
  $region6: #{gnn_stack_forward.9} parent=0 // loop_footer
    %s15 = sadd.s32 1, %s11
  $region7: #{gnn_stack_forward.9} parent=0 // loop_footer_branch
    %10 = sbr.rel target = $region3
  $region8: #{gnn_stack_forward.9} parent=0 // loop_exit
    _

// kernel: gnn_stack_forward.5
$region0: #{gnn_stack_forward.5}
  #allocation0 [shape = 'u32[]', space=smem, size = 0x4, offset = 0x4, fixed_abs, tag = 'smem constant byte address 0x4 - core index']
  #allocation1 [shape = 'u32[72,128]{1,0:T(1,128)}', space=vmem, size = 0x9000, scoped, tag = 'internal scratch']
  %s0 = inlined_call_operand.vmem [shape: f32[128,128], index: 0, kind: input, shape index: {}]
  %s1 = inlined_call_operand.vmem [shape: f32[128,128], index: 1, kind: input, shape index: {}]
  %s2 = inlined_call_operand.vmem [shape: bf16[128,128], index: 2, kind: output, shape index: {}]
  %s3 = sld [smem:[#allocation0]]
  $region41: #{gnn_stack_forward.5} parent=0
    _
  %s5 = ssub.s32 1, %s3
  %s6 = scalar_select 0, %s5, %s3
  loop: start=0, step=1, limit=4
  $region2: #{gnn_stack_forward.5} parent=0 // loop_pre_header
    _
  $region3: #{gnn_stack_forward.5} parent=0 // loop_header
    %s8 = sphi 0, %s12
    %p9 = scmp.ge.s32.totalorder %s8, 4
    %s18 = sphi 0, %s20
    %s21 = sphi 0, %s18
    %s22 = sphi 0, %s21
    %s38 = sphi 0, %s22
    %s42 = sphi 0, %s42
    %s44 = sphi 0, %s42
    %s45 = sphi 0, %s44
    %s59 = sphi 0, %s45
    %s65 = sphi 0, %s67
    %s68 = sphi 0, %s65
    %s69 = sphi 0, %s68
    %s85 = sphi 0, %s69
  $region4: #{gnn_stack_forward.5} parent=0 // loop_header_branch
    %11 = sbr.rel (%p9) target = $region8
  $region5: #{gnn_stack_forward.5} parent=0 // loop_body
    %s13 = ssub.s32 %s8, 1
    %s14 = ssub.s32 %s8, 2
    %s15 = sadd.s32 %s8, 1
    %s16 = ssub.s32 %s8, %s15
    %p17 = scmp.eq.s32.totalorder %s16, 0
    %s19 = sadd.s32 %s18, 1
    %s20 = scalar_select %p17, %s18, %s19
    %p23 = pneg %p17
    %p24 = scmp.eq.s32.totalorder %s8, 1
    %p25 = por %p23, %p24
    %p26 = scmp.ne.s32.totalorder %s18, %s21
    %p27 = scmp.eq.s32.totalorder %s8, 0
    %p28 = por %p26, %p27
    %p29 = scmp.ne.s32.totalorder %s18, %s21
    %p30 = scmp.eq.s32.totalorder %s13, 1
    %p31 = por %p29, %p30
    %p32 = scmp.ne.s32.totalorder %s21, %s22
    %p33 = scmp.eq.s32.totalorder %s13, 0
    %p34 = por %p32, %p33
    %p35 = scmp.ne.s32.totalorder %s21, %s22
    %p36 = scmp.eq.s32.totalorder %s14, 1
    %p37 = por %p35, %p36
    %p39 = scmp.ne.s32.totalorder %s22, %s38
    %p40 = scmp.eq.s32.totalorder %s14, 0
    %p41 = por %p39, %p40
    %s43 = sadd.s32 %s42, 1
    %p46 = scmp.eq.s32.totalorder %s8, 1
    %p47 = scmp.ne.s32.totalorder %s42, %s44
    %p48 = scmp.eq.s32.totalorder %s8, 0
    %p49 = por %p47, %p48
    %p50 = scmp.ne.s32.totalorder %s42, %s44
    %p51 = scmp.eq.s32.totalorder %s13, 1
    %p52 = por %p50, %p51
    %p53 = scmp.ne.s32.totalorder %s44, %s45
    %p54 = scmp.eq.s32.totalorder %s13, 0
    %p55 = por %p53, %p54
    %p56 = scmp.ne.s32.totalorder %s44, %s45
    %p57 = scmp.eq.s32.totalorder %s14, 1
    %p58 = por %p56, %p57
    %p60 = scmp.ne.s32.totalorder %s45, %s59
    %p61 = scmp.eq.s32.totalorder %s14, 0
    %p62 = por %p60, %p61
    %s63 = ssub.s32 %s8, %s15
    %p64 = scmp.eq.s32.totalorder %s63, 0
    %s66 = sadd.s32 %s65, 1
    %s67 = scalar_select %p64, %s65, %s66
    %p70 = pneg %p64
    %p71 = scmp.eq.s32.totalorder %s8, 1
    %p72 = por %p70, %p71
    %p73 = scmp.ne.s32.totalorder %s65, %s68
    %p74 = scmp.eq.s32.totalorder %s8, 0
    %p75 = por %p73, %p74
    %p76 = scmp.ne.s32.totalorder %s65, %s68
    %p77 = scmp.eq.s32.totalorder %s13, 1
    %p78 = por %p76, %p77
    %p79 = scmp.ne.s32.totalorder %s68, %s69
    %p80 = scmp.eq.s32.totalorder %s13, 0
    %p81 = por %p79, %p80
    %p82 = scmp.ne.s32.totalorder %s68, %s69
    %p83 = scmp.eq.s32.totalorder %s14, 1
    %p84 = por %p82, %p83
    %p86 = scmp.ne.s32.totalorder %s69, %s85
    %p87 = scmp.eq.s32.totalorder %s14, 0
    %p88 = por %p86, %p87
    %p89 = scmp.le.s32.totalorder 1, %s8
    %p90 = scmp.lt.s32.totalorder %s8, 3
    %p91 = pnand %p89, %p90
    %p92 = pneg %p91
    // Predicated region
    $region9: #{gnn_stack_forward.5} parent=5 // pred_check
      _
    $region10: #{gnn_stack_forward.5} parent=5 // pred_check_branch
      %94 = sbr.rel (%p91) target = $region12
    $region11: #{gnn_stack_forward.5} parent=5 // pred_region
      %s95 = ssub.s32 %s8, 1
      // Predicated region
      $region13: #{gnn_stack_forward.5} parent=11 // pred_check
        %p96 = pneg %p55
      $region14: #{gnn_stack_forward.5} parent=11 // pred_check_branch
        %98 = sbr.rel (%p96) target = $region16
      $region15: #{gnn_stack_forward.5} parent=11 // pred_region
        _
      $region16: #{gnn_stack_forward.5} parent=11 // pred_fallthru
        _
    $region12: #{gnn_stack_forward.5} parent=5 // pred_fallthru
      _
    %p99 = scmp.lt.s32.totalorder %s8, 2
    // Predicated region
    $region17: #{gnn_stack_forward.5} parent=5 // pred_check
      %p100 = pneg %p99
    $region18: #{gnn_stack_forward.5} parent=5 // pred_check_branch
      %102 = sbr.rel (%p100) target = $region20
    $region19: #{gnn_stack_forward.5} parent=5 // pred_region
      // Predicated region
      $region21: #{gnn_stack_forward.5} parent=19 // pred_check
        %p103 = pneg %p28
      $region22: #{gnn_stack_forward.5} parent=19 // pred_check_branch
        %105 = sbr.rel (%p103) target = $region24
      $region23: #{gnn_stack_forward.5} parent=19 // pred_region
        %s106 = smul.u32 8, %s8
        %p107 = scmp.lt.s32.totalorder %s106, 15
        %s108 = scalar_select %p107, %s106, 15
        %s109 = smul.addr %s108, 8
        %s110 = scalar_lea.vmem %s0, %s109
        %s111 = smul.u32 8, %s8
      $region24: #{gnn_stack_forward.5} parent=19 // pred_fallthru
        _
    $region20: #{gnn_stack_forward.5} parent=5 // pred_fallthru
      _
    %p112 = scmp.le.s32.totalorder 1, %s8
    %p113 = scmp.lt.s32.totalorder %s8, 3
    %p114 = pnand %p112, %p113
    %p115 = pneg %p114
    // Predicated region
    $region25: #{gnn_stack_forward.5} parent=5 // pred_check
      _
    $region26: #{gnn_stack_forward.5} parent=5 // pred_check_branch
      %117 = sbr.rel (%p114) target = $region28
    $region27: #{gnn_stack_forward.5} parent=5 // pred_region
      %s118 = ssub.s32 %s8, 1
      %s119 = smul.u32 8, %s13
      %p120 = scmp.lt.s32.totalorder %s119, 15
      %s121 = scalar_select %p120, %s119, 15
      %s122 = smul.addr %s121, 8
      %s123 = scalar_lea.vmem %s0, %s122
      %p124 = pneg %p34
      %p125 = pneg %p31
      %p126 = pneg %p55
      %p127 = pneg %p52
      %p128 = pneg %p81
      %p129 = pneg %p78
      %s130 = smul.u32 8, %s13
      %p131 = scmp.lt.s32.totalorder %s130, 15
      %s132 = scalar_select %p131, %s130, 15
      %s133 = smul.addr %s132, 4
      %s134 = scalar_lea.vmem %s2, %s133
      %s135 = smul.u32 8, %s13
      %p136 = scmp.lt.s32.totalorder %s135, 15
      %s137 = scalar_select %p136, %s135, 15
      %s138 = smul.addr %s137, 8
      %s139 = scalar_lea.vmem %s0, %s138
      %s140 = smul.u32 8, %s13
      %s141 = smul.u32 8, %s13
      %p142 = scmp.lt.s32.totalorder %s141, 15
      %s143 = scalar_select %p142, %s141, 15
      %s144 = smul.addr %s143, 4
      %s145 = scalar_lea.vmem %s2, %s144
      %s146 = smul.u32 8, %s13
      %v147 = vld [vmem:[%s139] sm:$0xff]
      %v148 = vld [vmem:[%s139 + $0x8] sm:$0xff]
      %v149 = vld [vmem:[%s139 + $0x10] sm:$0xff]
      %v150 = vld [vmem:[%s139 + $0x18] sm:$0xff]
      %v151 = vld [vmem:[%s139 + $0x20] sm:$0xff]
      %v152 = vld [vmem:[%s139 + $0x28] sm:$0xff]
      %v153 = vld [vmem:[%s139 + $0x30] sm:$0xff]
      %v154 = vld [vmem:[%s139 + $0x38] sm:$0xff]
      %v155 = vld [vmem:[%s1] sm:$0xff]
      %v156 = vld [vmem:[%s1 + $0x8] sm:$0xff]
      %v157 = vld [vmem:[%s1 + $0x10] sm:$0xff]
      %v158 = vld [vmem:[%s1 + $0x18] sm:$0xff]
      %v159 = vld [vmem:[%s1 + $0x20] sm:$0xff]
      %v160 = vld [vmem:[%s1 + $0x28] sm:$0xff]
      %v161 = vld [vmem:[%s1 + $0x30] sm:$0xff]
      %v162 = vld [vmem:[%s1 + $0x38] sm:$0xff]
      %v163 = vld [vmem:[%s1 + $0x40] sm:$0xff]
      %v164 = vld [vmem:[%s1 + $0x48] sm:$0xff]
      %v165 = vld [vmem:[%s1 + $0x50] sm:$0xff]
      %v166 = vld [vmem:[%s1 + $0x58] sm:$0xff]
      %v167 = vld [vmem:[%s1 + $0x60] sm:$0xff]
      %v168 = vld [vmem:[%s1 + $0x68] sm:$0xff]
      %v169 = vld [vmem:[%s1 + $0x70] sm:$0xff]
      %v170 = vld [vmem:[%s1 + $0x78] sm:$0xff]
      %171 = vmatpush.msra.mxu0 %v170
      %172 = vmatpush.msra.mxu0 %v169
      %173 = vmatpush.msra.mxu0 %v168
      %174 = vmatpush.msra.mxu0 %v167
      %175 = vmatpush.msra.mxu0 %v166
      %176 = vmatpush.msra.mxu0 %v165
      %177 = vmatpush.msra.mxu0 %v164
      %178 = vmatpush.msra.mxu0 %v163
      %179 = vmatpush.msra.mxu0 %v162
      %180 = vmatpush.msra.mxu0 %v161
      %181 = vmatpush.msra.mxu0 %v160
      %182 = vmatpush.msra.mxu0 %v159
      %183 = vmatpush.msra.mxu0 %v158
      %184 = vmatpush.msra.mxu0 %v157
      %185 = vmatpush.msra.mxu0 %v156
      %186 = vmatpush.msra.mxu0 %v155
      %187 = vmatmul.f32.gmra.mxu0 %v147
      %v188 = vpop.f32.mrf.mxu0
      %v189 = vadd.f32 0.0, %v188
      %190 = vmatmul.f32.gmra.mxu0 %v148
      %v191 = vpop.f32.mrf.mxu0
      %v192 = vadd.f32 0.0, %v191
      %193 = vmatmul.f32.gmra.mxu0 %v149
      %v194 = vpop.f32.mrf.mxu0
      %v195 = vadd.f32 0.0, %v194
      %196 = vmatmul.f32.gmra.mxu0 %v150
      %v197 = vpop.f32.mrf.mxu0
      %v198 = vadd.f32 0.0, %v197
      %199 = vmatmul.f32.gmra.mxu0 %v151
      %v200 = vpop.f32.mrf.mxu0
      %v201 = vadd.f32 0.0, %v200
      %202 = vmatmul.f32.gmra.mxu0 %v152
      %v203 = vpop.f32.mrf.mxu0
      %v204 = vadd.f32 0.0, %v203
      %205 = vmatmul.f32.gmra.mxu0 %v153
      %v206 = vpop.f32.mrf.mxu0
      %v207 = vadd.f32 0.0, %v206
      %208 = vmatmul.f32.gmra.mxu0 %v154
      %v209 = vpop.f32.mrf.mxu0
      %v210 = vadd.f32 0.0, %v209
      %211 = vdwg.mxu0
      %v212 = vpack.c.bf16 %v189, %v189
      %v213 = vpack.c.bf16 %v192, %v192
      %v214 = vpack.c.bf16 %v195, %v195
      %v215 = vpack.c.bf16 %v198, %v198
      %v216 = vpack.c.bf16 %v201, %v201
      %v217 = vpack.c.bf16 %v204, %v204
      %v218 = vpack.c.bf16 %v207, %v207
      %v219 = vpack.c.bf16 %v210, %v210
      %220 = vst [vmem:[%s145] sm:$0xf] %v212
      %221 = vst [vmem:[%s145 + $0x4] sm:$0xf] %v213
      %222 = vst [vmem:[%s145 + $0x8] sm:$0xf] %v214
      %223 = vst [vmem:[%s145 + $0xc] sm:$0xf] %v215
      %224 = vst [vmem:[%s145 + $0x10] sm:$0xf] %v216
      %225 = vst [vmem:[%s145 + $0x14] sm:$0xf] %v217
      %226 = vst [vmem:[%s145 + $0x18] sm:$0xf] %v218
      %227 = vst [vmem:[%s145 + $0x1c] sm:$0xf] %v219
      %s228 = smul.u32 8, %s13
      %p229 = scmp.lt.s32.totalorder %s228, 15
      %s230 = scalar_select %p229, %s228, 15
      %s231 = smul.addr %s230, 4
      %s232 = scalar_lea.vmem %s2, %s231
      // Predicated region
      $region29: #{gnn_stack_forward.5} parent=27 // pred_check
        %p233 = pneg %p78
      $region30: #{gnn_stack_forward.5} parent=27 // pred_check_branch
        %235 = sbr.rel (%p233) target = $region32
      $region31: #{gnn_stack_forward.5} parent=27 // pred_region
        %s236 = smul.u32 8, %s13
      $region32: #{gnn_stack_forward.5} parent=27 // pred_fallthru
        _
    $region28: #{gnn_stack_forward.5} parent=5 // pred_fallthru
      _
    %p237 = scmp.le.s32.totalorder 2, %s8
    // Predicated region
    $region33: #{gnn_stack_forward.5} parent=5 // pred_check
      %p238 = pneg %p237
    $region34: #{gnn_stack_forward.5} parent=5 // pred_check_branch
      %240 = sbr.rel (%p238) target = $region36
    $region35: #{gnn_stack_forward.5} parent=5 // pred_region
      %s241 = ssub.s32 %s8, 2
      // Predicated region
      $region37: #{gnn_stack_forward.5} parent=35 // pred_check
        %p242 = pneg %p84
      $region38: #{gnn_stack_forward.5} parent=35 // pred_check_branch
        %244 = sbr.rel (%p242) target = $region40
      $region39: #{gnn_stack_forward.5} parent=35 // pred_region
        %s245 = smul.u32 8, %s14
        %p246 = scmp.lt.s32.totalorder %s245, 15
        %s247 = scalar_select %p246, %s245, 15
        %s248 = smul.addr %s247, 4
        %s249 = scalar_lea.vmem %s2, %s248
      $region40: #{gnn_stack_forward.5} parent=35 // pred_fallthru
        _
    $region36: #{gnn_stack_forward.5} parent=5 // pred_fallthru
      _
  $region6: #{gnn_stack_forward.5} parent=0 // loop_footer
    %s12 = sadd.s32 1, %s8
  $region7: #{gnn_stack_forward.5} parent=0 // loop_footer_branch
    %7 = sbr.rel target = $region3
  $region8: #{gnn_stack_forward.5} parent=0 // loop_exit
    _

</llo_original>
